<compile_context>
chip_gen: v7x
topology: tpu7x:2x2x1
jax: 0.10.0
libtpu: 0.0.40
codegen_flags: <defaults>
</compile_context>

<pallas_src>
import functools

import jax
import jax.numpy as jnp
from jax import lax
from jax.experimental import pallas as pl
from jax.experimental.pallas import tpu as pltpu

_SQRT2_INV = 0.7071067811865476  # 1/sqrt(2)
_LN_EPS = 1e-5


def projection_head_kernel(x_ref, w1_ref, b1_ref, w2_ref, b2_ref,
                           gamma_ref, beta_ref, o_ref,
                           *, compute_dtype, approximate_gelu, inv_p):
    # Hoist the (1, P) parameter loads once per grid step.
    b1 = b1_ref[...]
    b2 = b2_ref[...]
    gamma = gamma_ref[...]
    beta = beta_ref[...]

    x = x_ref[...]
    if compute_dtype is not None:
        # In-kernel cast (cheap VPU pack, hidden under MXU/DMA). Avoids a
        # separate wrapper-side cast kernel that re-reads all of x from HBM.
        x = x.astype(compute_dtype)

    # projected = x @ W1 + b1   (MXU; operands in x/w1 dtype, f32 accumulation)
    projected = jnp.dot(x, w1_ref[...],
                        preferred_element_type=jnp.float32) + b1

    if approximate_gelu:
        # tanh-based GELU -> EUP slot (otherwise idle here). Matches
        # torch.nn.GELU(approximate='tanh') semantics, NOT the module default.
        h = jax.nn.gelu(projected, approximate=True)
    else:
        # Exact erf-based GELU, matching torch.nn.GELU() default semantics.
        h = 0.5 * projected * (1.0 + lax.erf(projected * _SQRT2_INV))

    # y = gelu(projected) @ W2 + b2   (MXU; cast h to the weight dtype, f32 acc)
    y = jnp.dot(h.astype(w2_ref.dtype), w2_ref[...],
                preferred_element_type=jnp.float32) + b2

    # Dropout is identity in inference mode.
    # TODO(synk): training-mode dropout (pltpu.prng_random_bits mask) not implemented.

    # Residual connection (post-bias, pre-GELU "projected", as in the module).
    y = y + projected

    # LayerNorm over the last dim, eps=1e-5, affine params. Fused statistics:
    # one pass producing sum(y) and sum(y*y); var = E[y^2] - mean^2 (f32, stable
    # at LN magnitudes).
    s1 = jnp.sum(y, axis=-1, keepdims=True)
    s2 = jnp.sum(y * y, axis=-1, keepdims=True)
    mean = s1 * inv_p
    var = s2 * inv_p - mean * mean
    y = (y - mean) * lax.rsqrt(var + _LN_EPS)
    y = y * gamma + beta

    o_ref[...] = y.astype(o_ref.dtype)


def _round_up(n, m):
    return ((n + m - 1) // m) * m


def projection_head(x, w1, b1, w2, b2, gamma, beta, *,
                    block_b=512, compute_dtype=None, approximate_gelu=False,
                    out_dtype=None):
    """x: (B, E); w1: (E, P); w2: (P, P); b1/b2/gamma/beta: (1, P).

    block_b:          max rows per batch tile (512 default; sweep 512/1024).
    compute_dtype:    if set (e.g. jnp.bfloat16), matmul operands are used in that
                      dtype (x cast in-kernel, weights cast once here) for MXU
                      throughput; accumulation, GELU, residual and LN stay in f32.
                      Recommended on v5e, whose MXU is bf16-native.
    approximate_gelu: use tanh-approx GELU (EUP) instead of exact erf (VALU poly).
    out_dtype:        output dtype (defaults to x.dtype); bf16 halves writeback.
    """
    B, E = x.shape
    P = w1.shape[1]
    if out_dtype is None:
        out_dtype = x.dtype

    if compute_dtype is not None:
        # Weights are grid-resident (DMA'd once) and tiny; cast them once here.
        # Ideally pre-cast at parameter-init time, outside the per-call path.
        w1 = w1.astype(compute_dtype)
        w2 = w2.astype(compute_dtype)
        # NOTE: x is intentionally NOT cast here; the cast happens per tile
        # inside the kernel to avoid doubling x HBM traffic.

    # Batch tile selection:
    #  * B small (<256): single full-batch tile.
    #  * B >= 256: guarantee >= 2 grid steps so the "parallel" batch axis is
    #    sharded across both TensorCores on v7x; cap at block_b rows and keep
    #    tiles a multiple of 128 rows to keep the MXU cadence full.
    if B < 256:
        TB = B
    else:
        TB = min(block_b, _round_up(pl.cdiv(B, 2), 128))
        TB = min(TB, B)
    grid = (pl.cdiv(B, TB),)
    # TODO(synk): non-divisible B (partial last tile) not exercised/tested here.

    itemsize = lambda a: a.size * a.dtype.itemsize
    cost = pl.CostEstimate(
        flops=2 * B * E * P + 2 * B * P * P,
        # rsqrt per row (+ tanh per element if approximate); exact erf lowers
        # to a VALU polynomial, not an EUP op, so it is not counted here.
        transcendentals=(B * P + B) if approximate_gelu else B,
        bytes_accessed=(itemsize(x) + itemsize(w1) + itemsize(b1)
                        + itemsize(w2) + itemsize(b2) + itemsize(gamma)
                        + itemsize(beta) + B * P * jnp.dtype(out_dtype).itemsize),
    )

    kernel = functools.partial(
        projection_head_kernel,
        compute_dtype=compute_dtype,
        approximate_gelu=approximate_gelu,
        inv_p=1.0 / float(P),
    )

    return pl.pallas_call(
        kernel,
        out_shape=jax.ShapeDtypeStruct((B, P), out_dtype),
        grid=grid,
        in_specs=[
            pl.BlockSpec((TB, E), lambda i: (i, 0)),   # x: tiled over batch
            pl.BlockSpec((E, P), lambda i: (0, 0)),    # w1: resident
            pl.BlockSpec((1, P), lambda i: (0, 0)),    # b1: resident
            pl.BlockSpec((P, P), lambda i: (0, 0)),    # w2: resident
            pl.BlockSpec((1, P), lambda i: (0, 0)),    # b2: resident
            pl.BlockSpec((1, P), lambda i: (0, 0)),    # gamma: resident
            pl.BlockSpec((1, P), lambda i: (0, 0)),    # beta: resident
        ],
        out_specs=pl.BlockSpec((TB, P), lambda i: (i, 0)),
        compiler_params=pltpu.CompilerParams(
            dimension_semantics=("parallel",),         # megacore-shard batch on v7x
        ),
        cost_estimate=cost,
    )(x, w1, b1, w2, b2, gamma, beta)


def _reference(x, w1, b1, w2, b2, gamma, beta, *, approximate_gelu=False):
    projected = x @ w1 + b1
    if approximate_gelu:
        h = jax.nn.gelu(projected, approximate=True)
    else:
        h = 0.5 * projected * (1.0 + lax.erf(projected * _SQRT2_INV))
    y = h @ w2 + b2
    y = y + projected
    mean = jnp.mean(y, axis=-1, keepdims=True)
    var = jnp.mean((y - mean) ** 2, axis=-1, keepdims=True)
    y = (y - mean) * lax.rsqrt(var + _LN_EPS)
    return y * gamma + beta


if __name__ == "__main__":
    # Small shapes implied by the module (batch of embeddings -> projection),
    # sized so the batch grid has 2 steps (B=512 -> TB=256, grid=(2,)), which
    # also exercises the v7x dual-TensorCore sharding path.
    B = 512            # batch
    E = 64             # embedding_dim
    P = 128            # projection_dim (CFG.projection_dim stand-in)

    key = jax.random.PRNGKey(0)
    k1, k2, k3, k4, kx = jax.random.split(key, 5)

    # Deterministic parameter init (Linear: uniform(-1/sqrt(fan_in), 1/sqrt(fan_in))).
    bound1 = 1.0 / jnp.sqrt(E)
    w1 = jax.random.uniform(k1, (E, P), jnp.float32, -bound1, bound1)
    b1 = jax.random.uniform(k2, (1, P), jnp.float32, -bound1, bound1)
    bound2 = 1.0 / jnp.sqrt(P)
    w2 = jax.random.uniform(k3, (P, P), jnp.float32, -bound2, bound2)
    b2 = jax.random.uniform(k4, (1, P), jnp.float32, -bound2, bound2)
    gamma = jnp.ones((1, P), jnp.float32)   # nn.LayerNorm default weight
    beta = jnp.zeros((1, P), jnp.float32)   # nn.LayerNorm default bias

    x = jax.random.normal(kx, (B, E), jnp.float32)

    ref = _reference(x, w1, b1, w2, b2, gamma, beta)

    # 1) f32 MXU path, exact erf GELU (matches torch.nn.GELU() default).
    out = projection_head(x, w1, b1, w2, b2, gamma, beta)
    out = jax.block_until_ready(out)
    assert out.shape == (B, P)
    assert jnp.allclose(out, ref, atol=1e-4, rtol=1e-4), "f32 path mismatch vs reference"

    # 2) bf16-operand / f32-accumulate MXU path (v5e/v6e/v7x fast path; x cast in-kernel).
    out_bf16 = projection_head(x, w1, b1, w2, b2, gamma, beta,
                               compute_dtype=jnp.bfloat16)
    out_bf16 = jax.block_until_ready(out_bf16)
    assert out_bf16.shape == (B, P)
    assert jnp.allclose(out_bf16, ref, atol=5e-2, rtol=5e-2), "bf16 path mismatch vs reference"

    # 3) tanh-approximate GELU path (EUP offload), checked against a tanh reference.
    ref_tanh = _reference(x, w1, b1, w2, b2, gamma, beta, approximate_gelu=True)
    out_tanh = projection_head(x, w1, b1, w2, b2, gamma, beta,
                               approximate_gelu=True)
    out_tanh = jax.block_until_ready(out_tanh)
    assert out_tanh.shape == (B, P)
    assert jnp.allclose(out_tanh, ref_tanh, atol=1e-4, rtol=1e-4), \
        "tanh-approx path mismatch vs tanh reference"

    print("KERNEL_OK")
</pallas_src>

<mosaic_0001>
module attributes {stable_mosaic.version = 11 : i64} {
  func.func @projection_head_kernel(%arg0: i32, %arg1: memref<256x64xf32, #tpu.memory_space<vmem>>, %arg2: memref<64x128xf32, #tpu.memory_space<vmem>>, %arg3: memref<1x128xf32, #tpu.memory_space<vmem>>, %arg4: memref<128x128xf32, #tpu.memory_space<vmem>>, %arg5: memref<1x128xf32, #tpu.memory_space<vmem>>, %arg6: memref<1x128xf32, #tpu.memory_space<vmem>>, %arg7: memref<1x128xf32, #tpu.memory_space<vmem>>, %arg8: memref<256x128xf32, #tpu.memory_space<vmem>>) attributes {dimension_semantics = [#tpu.dimension_semantics<parallel>], iteration_bounds = array<i64: 2>, scalar_prefetch = 0 : i64, scratch_operands = 0 : i64, tpu.core_type = #tpu.core_type<tc>, window_params = [{transform_indices = @transform_0, window_bounds = array<i64: 256, 64>}, {pipeline_mode = #tpu.pipeline_mode<synchronous>, transform_indices = @transform_1, window_bounds = array<i64: 64, 128>}, {pipeline_mode = #tpu.pipeline_mode<synchronous>, transform_indices = @transform_2, window_bounds = array<i64: 1, 128>}, {pipeline_mode = #tpu.pipeline_mode<synchronous>, transform_indices = @transform_3, window_bounds = array<i64: 128, 128>}, {pipeline_mode = #tpu.pipeline_mode<synchronous>, transform_indices = @transform_4, window_bounds = array<i64: 1, 128>}, {pipeline_mode = #tpu.pipeline_mode<synchronous>, transform_indices = @transform_5, window_bounds = array<i64: 1, 128>}, {pipeline_mode = #tpu.pipeline_mode<synchronous>, transform_indices = @transform_6, window_bounds = array<i64: 1, 128>}, {transform_indices = @transform_7, window_bounds = array<i64: 256, 128>}]} {
    %c0 = arith.constant 0 : index
    %c0_0 = arith.constant 0 : index
    %0 = vector.load %arg3[%c0, %c0_0] : memref<1x128xf32, #tpu.memory_space<vmem>>, vector<1x128xf32>
    %c0_1 = arith.constant 0 : index
    %c0_2 = arith.constant 0 : index
    %1 = vector.load %arg5[%c0_1, %c0_2] : memref<1x128xf32, #tpu.memory_space<vmem>>, vector<1x128xf32>
    %c0_3 = arith.constant 0 : index
    %c0_4 = arith.constant 0 : index
    %2 = vector.load %arg6[%c0_3, %c0_4] : memref<1x128xf32, #tpu.memory_space<vmem>>, vector<1x128xf32>
    %c0_5 = arith.constant 0 : index
    %c0_6 = arith.constant 0 : index
    %3 = vector.load %arg7[%c0_5, %c0_6] : memref<1x128xf32, #tpu.memory_space<vmem>>, vector<1x128xf32>
    %c0_7 = arith.constant 0 : index
    %c0_8 = arith.constant 0 : index
    %4 = vector.load %arg1[%c0_7, %c0_8] : memref<256x64xf32, #tpu.memory_space<vmem>>, vector<256x64xf32>
    %c0_9 = arith.constant 0 : index
    %c0_10 = arith.constant 0 : index
    %5 = vector.load %arg2[%c0_9, %c0_10] : memref<64x128xf32, #tpu.memory_space<vmem>>, vector<64x128xf32>
    %cst = arith.constant dense<0.000000e+00> : vector<256x128xf32>
    %6 = tpu.matmul %4, %5, %cst {dimension_numbers = #tpu.dot_dimension_numbers<[1], [0], [0], [1], [0, 0, 1, 1], [], []>} : vector<256x64xf32>, vector<64x128xf32>, vector<256x128xf32> -> vector<256x128xf32>
    %7 = vector.broadcast %0 : vector<1x128xf32> to vector<256x128xf32>
    %8 = arith.addf %6, %7 : vector<256x128xf32>
    %cst_11 = arith.constant 5.000000e-01 : f32
    %9 = vector.broadcast %cst_11 : f32 to vector<256x128xf32>
    %10 = arith.mulf %9, %8 : vector<256x128xf32>
    %cst_12 = arith.constant 0.707106769 : f32
    %11 = vector.broadcast %cst_12 : f32 to vector<256x128xf32>
    %12 = arith.mulf %8, %11 : vector<256x128xf32>
    %13 = math.erf %12 : vector<256x128xf32>
    %cst_13 = arith.constant 1.000000e+00 : f32
    %14 = vector.broadcast %cst_13 : f32 to vector<256x128xf32>
    %15 = arith.addf %14, %13 : vector<256x128xf32>
    %16 = arith.mulf %10, %15 : vector<256x128xf32>
    %c0_14 = arith.constant 0 : index
    %c0_15 = arith.constant 0 : index
    %17 = vector.load %arg4[%c0_14, %c0_15] : memref<128x128xf32, #tpu.memory_space<vmem>>, vector<128x128xf32>
    %cst_16 = arith.constant dense<0.000000e+00> : vector<256x128xf32>
    %18 = tpu.matmul %16, %17, %cst_16 {dimension_numbers = #tpu.dot_dimension_numbers<[1], [0], [0], [1], [0, 0, 1, 1], [], []>} : vector<256x128xf32>, vector<128x128xf32>, vector<256x128xf32> -> vector<256x128xf32>
    %19 = vector.broadcast %1 : vector<1x128xf32> to vector<256x128xf32>
    %20 = arith.addf %18, %19 : vector<256x128xf32>
    %21 = arith.addf %20, %8 : vector<256x128xf32>
    %cst_17 = arith.constant dense<0.000000e+00> : vector<256xf32>
    %22 = vector.multi_reduction <add>, %21, %cst_17 [1] : vector<256x128xf32> to vector<256xf32>
    %23 = vector.shape_cast %22 : vector<256xf32> to vector<256x1xf32>
    %24 = arith.mulf %21, %21 : vector<256x128xf32>
    %cst_18 = arith.constant dense<0.000000e+00> : vector<256xf32>
    %25 = vector.multi_reduction <add>, %24, %cst_18 [1] : vector<256x128xf32> to vector<256xf32>
    %26 = vector.shape_cast %25 : vector<256xf32> to vector<256x1xf32>
    %cst_19 = arith.constant 7.812500e-03 : f32
    %27 = vector.broadcast %cst_19 : f32 to vector<256x1xf32>
    %28 = arith.mulf %23, %27 : vector<256x1xf32>
    %cst_20 = arith.constant 7.812500e-03 : f32
    %29 = vector.broadcast %cst_20 : f32 to vector<256x1xf32>
    %30 = arith.mulf %26, %29 : vector<256x1xf32>
    %31 = arith.mulf %28, %28 : vector<256x1xf32>
    %32 = arith.subf %30, %31 : vector<256x1xf32>
    %33 = vector.broadcast %28 : vector<256x1xf32> to vector<256x128xf32>
    %34 = arith.subf %21, %33 : vector<256x128xf32>
    %cst_21 = arith.constant 9.99999974E-6 : f32
    %35 = vector.broadcast %cst_21 : f32 to vector<256x1xf32>
    %36 = arith.addf %32, %35 : vector<256x1xf32>
    %37 = math.rsqrt %36 : vector<256x1xf32>
    %38 = vector.broadcast %37 : vector<256x1xf32> to vector<256x128xf32>
    %39 = arith.mulf %34, %38 : vector<256x128xf32>
    %40 = vector.broadcast %2 : vector<1x128xf32> to vector<256x128xf32>
    %41 = arith.mulf %39, %40 : vector<256x128xf32>
    %42 = vector.broadcast %3 : vector<1x128xf32> to vector<256x128xf32>
    %43 = arith.addf %41, %42 : vector<256x128xf32>
    %c0_22 = arith.constant 0 : index
    %c0_23 = arith.constant 0 : index
    %44 = vector.load %arg8[%c0_22, %c0_23] : memref<256x128xf32, #tpu.memory_space<vmem>>, vector<256x128xf32>
    tpu.vector_store %arg8[%c0_22, %c0_23], %43 {strides = array<i32>} : memref<256x128xf32, #tpu.memory_space<vmem>>, vector<256x128xf32>,
    return
  }
  func.func @transform_0(%arg0: i32) -> (i32, i32) {
    %c0_i32 = arith.constant 0 : i32
    %c0_i32_0 = arith.constant 0 : i32
    return %arg0, %c0_i32 : i32, i32
  }
  func.func @transform_1(%arg0: i32) -> (i32, i32) {
    %c0_i32 = arith.constant 0 : i32
    %c0_i32_0 = arith.constant 0 : i32
    %c0_i32_1 = arith.constant 0 : i32
    return %c0_i32, %c0_i32_0 : i32, i32
  }
  func.func @transform_2(%arg0: i32) -> (i32, i32) {
    %c0_i32 = arith.constant 0 : i32
    %c0_i32_0 = arith.constant 0 : i32
    %c0_i32_1 = arith.constant 0 : i32
    return %c0_i32, %c0_i32_0 : i32, i32
  }
  func.func @transform_3(%arg0: i32) -> (i32, i32) {
    %c0_i32 = arith.constant 0 : i32
    %c0_i32_0 = arith.constant 0 : i32
    %c0_i32_1 = arith.constant 0 : i32
    return %c0_i32, %c0_i32_0 : i32, i32
  }
  func.func @transform_4(%arg0: i32) -> (i32, i32) {
    %c0_i32 = arith.constant 0 : i32
    %c0_i32_0 = arith.constant 0 : i32
    %c0_i32_1 = arith.constant 0 : i32
    return %c0_i32, %c0_i32_0 : i32, i32
  }
  func.func @transform_5(%arg0: i32) -> (i32, i32) {
    %c0_i32 = arith.constant 0 : i32
    %c0_i32_0 = arith.constant 0 : i32
    %c0_i32_1 = arith.constant 0 : i32
    return %c0_i32, %c0_i32_0 : i32, i32
  }
  func.func @transform_6(%arg0: i32) -> (i32, i32) {
    %c0_i32 = arith.constant 0 : i32
    %c0_i32_0 = arith.constant 0 : i32
    %c0_i32_1 = arith.constant 0 : i32
    return %c0_i32, %c0_i32_0 : i32, i32
  }
  func.func @transform_7(%arg0: i32) -> (i32, i32) {
    %c0_i32 = arith.constant 0 : i32
    %c0_i32_0 = arith.constant 0 : i32
    return %arg0, %c0_i32 : i32, i32
  }
}

</mosaic_0001>

<llo_original>
// kernel: tpu_custom_call.1
$region0: #{tpu_custom_call.1}
  #allocation0 [shape = 'u32[]', space=smem, size = 0x4, offset = 0x4, fixed_abs, tag = 'smem constant byte address 0x4 - core index']
  #allocation1 [shape = 'u32[144,128]{1,0:T(1,128)}', space=vmem, size = 0x12000, scoped, tag = 'internal scratch']
  %s0 = inlined_call_operand.vmem [shape: f32[512,64], index: 0, kind: input, shape index: {}]
  %s1 = inlined_call_operand.vmem [shape: f32[64,128], index: 1, kind: input, shape index: {}]
  %s2 = inlined_call_operand.vmem [shape: f32[1,128], index: 2, kind: input, shape index: {}]
  %s3 = inlined_call_operand.vmem [shape: f32[128,128], index: 3, kind: input, shape index: {}]
  %s4 = inlined_call_operand.vmem [shape: f32[1,128], index: 4, kind: input, shape index: {}]
  %s5 = inlined_call_operand.vmem [shape: f32[1,128], index: 5, kind: input, shape index: {}]
  %s6 = inlined_call_operand.vmem [shape: f32[1,128], index: 6, kind: input, shape index: {}]
  %s7 = inlined_call_operand.hbm [shape: f32[512,128], index: 7, kind: output, shape index: {}]
  %s8 = sld [smem:[#allocation0]]
  $region61: #{tpu_custom_call.1} parent=0
    _
  %s10 = ssub.s32 1, %s8
  %s11 = scalar_select 0, %s10, %s8
  $region1: #{tpu_custom_call.1} parent=0
    #allocation2 [shape = 'u8[262144]{0}', space=vmem, size = 0x40000, scoped, tag = 'output window, operand 0']
    #allocation3 [shape = 's32[2]{0}', space=sflag, size = 0x8, scoped, tag = 'scoped memory for tpu_custom_call.1']
    %12 = vsyncpa [#allocation3], 0
    %s13 = scalar_lea.sflag [#allocation3], 1
    %14 = vsyncpa %s13, 0
    loop: start=0, step=1, limit=4
    $region2: #{tpu_custom_call.1} parent=1 // loop_pre_header
      _
    $region3: #{tpu_custom_call.1} parent=1 // loop_header
      %s16 = sphi 0, %s20
      %p17 = scmp.ge.s32.totalorder %s16, 4
      %s26 = sphi 0, %s28
      %s29 = sphi 0, %s26
      %s30 = sphi 0, %s29
      %s46 = sphi 0, %s30
      %s50 = sphi 0, %s50
      %s52 = sphi 0, %s50
      %s53 = sphi 0, %s52
      %s67 = sphi 0, %s53
      %s71 = sphi 0, %s71
      %s73 = sphi 0, %s71
      %s74 = sphi 0, %s73
      %s88 = sphi 0, %s74
      %s92 = sphi 0, %s92
      %s94 = sphi 0, %s92
      %s95 = sphi 0, %s94
      %s109 = sphi 0, %s95
      %s113 = sphi 0, %s113
      %s115 = sphi 0, %s113
      %s116 = sphi 0, %s115
      %s130 = sphi 0, %s116
      %s134 = sphi 0, %s134
      %s136 = sphi 0, %s134
      %s137 = sphi 0, %s136
      %s151 = sphi 0, %s137
      %s155 = sphi 0, %s155
      %s157 = sphi 0, %s155
      %s158 = sphi 0, %s157
      %s172 = sphi 0, %s158
      %s178 = sphi 0, %s180
      %s181 = sphi 0, %s178
      %s182 = sphi 0, %s181
      %s198 = sphi 0, %s182
    $region4: #{tpu_custom_call.1} parent=1 // loop_header_branch
      %19 = sbr.rel (%p17) target = $region8
    $region5: #{tpu_custom_call.1} parent=1 // loop_body
      %s21 = ssub.s32 %s16, 1
      %s22 = ssub.s32 %s16, 2
      %s23 = sadd.s32 %s16, 1
      %s24 = ssub.s32 %s16, %s23
      %p25 = scmp.eq.s32.totalorder %s24, 0
      %s27 = sadd.s32 %s26, 1
      %s28 = scalar_select %p25, %s26, %s27
      %p31 = pneg %p25
      %p32 = scmp.eq.s32.totalorder %s16, 1
      %p33 = por %p31, %p32
      %p34 = scmp.ne.s32.totalorder %s26, %s29
      %p35 = scmp.eq.s32.totalorder %s16, 0
      %p36 = por %p34, %p35
      %p37 = scmp.ne.s32.totalorder %s26, %s29
      %p38 = scmp.eq.s32.totalorder %s21, 1
      %p39 = por %p37, %p38
      %p40 = scmp.ne.s32.totalorder %s29, %s30
      %p41 = scmp.eq.s32.totalorder %s21, 0
      %p42 = por %p40, %p41
      %p43 = scmp.ne.s32.totalorder %s29, %s30
      %p44 = scmp.eq.s32.totalorder %s22, 1
      %p45 = por %p43, %p44
      %p47 = scmp.ne.s32.totalorder %s30, %s46
      %p48 = scmp.eq.s32.totalorder %s22, 0
      %p49 = por %p47, %p48
      %s51 = sadd.s32 %s50, 1
      %p54 = scmp.eq.s32.totalorder %s16, 1
      %p55 = scmp.ne.s32.totalorder %s50, %s52
      %p56 = scmp.eq.s32.totalorder %s16, 0
      %p57 = por %p55, %p56
      %p58 = scmp.ne.s32.totalorder %s50, %s52
      %p59 = scmp.eq.s32.totalorder %s21, 1
      %p60 = por %p58, %p59
      %p61 = scmp.ne.s32.totalorder %s52, %s53
      %p62 = scmp.eq.s32.totalorder %s21, 0
      %p63 = por %p61, %p62
      %p64 = scmp.ne.s32.totalorder %s52, %s53
      %p65 = scmp.eq.s32.totalorder %s22, 1
      %p66 = por %p64, %p65
      %p68 = scmp.ne.s32.totalorder %s53, %s67
      %p69 = scmp.eq.s32.totalorder %s22, 0
      %p70 = por %p68, %p69
      %s72 = sadd.s32 %s71, 1
      %p75 = scmp.eq.s32.totalorder %s16, 1
      %p76 = scmp.ne.s32.totalorder %s71, %s73
      %p77 = scmp.eq.s32.totalorder %s16, 0
      %p78 = por %p76, %p77
      %p79 = scmp.ne.s32.totalorder %s71, %s73
      %p80 = scmp.eq.s32.totalorder %s21, 1
      %p81 = por %p79, %p80
      %p82 = scmp.ne.s32.totalorder %s73, %s74
      %p83 = scmp.eq.s32.totalorder %s21, 0
      %p84 = por %p82, %p83
      %p85 = scmp.ne.s32.totalorder %s73, %s74
      %p86 = scmp.eq.s32.totalorder %s22, 1
      %p87 = por %p85, %p86
      %p89 = scmp.ne.s32.totalorder %s74, %s88
      %p90 = scmp.eq.s32.totalorder %s22, 0
      %p91 = por %p89, %p90
      %s93 = sadd.s32 %s92, 1
      %p96 = scmp.eq.s32.totalorder %s16, 1
      %p97 = scmp.ne.s32.totalorder %s92, %s94
      %p98 = scmp.eq.s32.totalorder %s16, 0
      %p99 = por %p97, %p98
      %p100 = scmp.ne.s32.totalorder %s92, %s94
      %p101 = scmp.eq.s32.totalorder %s21, 1
      %p102 = por %p100, %p101
      %p103 = scmp.ne.s32.totalorder %s94, %s95
      %p104 = scmp.eq.s32.totalorder %s21, 0
      %p105 = por %p103, %p104
      %p106 = scmp.ne.s32.totalorder %s94, %s95
      %p107 = scmp.eq.s32.totalorder %s22, 1
      %p108 = por %p106, %p107
      %p110 = scmp.ne.s32.totalorder %s95, %s109
      %p111 = scmp.eq.s32.totalorder %s22, 0
      %p112 = por %p110, %p111
      %s114 = sadd.s32 %s113, 1
      %p117 = scmp.eq.s32.totalorder %s16, 1
      %p118 = scmp.ne.s32.totalorder %s113, %s115
      %p119 = scmp.eq.s32.totalorder %s16, 0
      %p120 = por %p118, %p119
      %p121 = scmp.ne.s32.totalorder %s113, %s115
      %p122 = scmp.eq.s32.totalorder %s21, 1
      %p123 = por %p121, %p122
      %p124 = scmp.ne.s32.totalorder %s115, %s116
      %p125 = scmp.eq.s32.totalorder %s21, 0
      %p126 = por %p124, %p125
      %p127 = scmp.ne.s32.totalorder %s115, %s116
      %p128 = scmp.eq.s32.totalorder %s22, 1
      %p129 = por %p127, %p128
      %p131 = scmp.ne.s32.totalorder %s116, %s130
      %p132 = scmp.eq.s32.totalorder %s22, 0
      %p133 = por %p131, %p132
      %s135 = sadd.s32 %s134, 1
      %p138 = scmp.eq.s32.totalorder %s16, 1
      %p139 = scmp.ne.s32.totalorder %s134, %s136
      %p140 = scmp.eq.s32.totalorder %s16, 0
      %p141 = por %p139, %p140
      %p142 = scmp.ne.s32.totalorder %s134, %s136
      %p143 = scmp.eq.s32.totalorder %s21, 1
      %p144 = por %p142, %p143
      %p145 = scmp.ne.s32.totalorder %s136, %s137
      %p146 = scmp.eq.s32.totalorder %s21, 0
      %p147 = por %p145, %p146
      %p148 = scmp.ne.s32.totalorder %s136, %s137
      %p149 = scmp.eq.s32.totalorder %s22, 1
      %p150 = por %p148, %p149
      %p152 = scmp.ne.s32.totalorder %s137, %s151
      %p153 = scmp.eq.s32.totalorder %s22, 0
      %p154 = por %p152, %p153
      %s156 = sadd.s32 %s155, 1
      %p159 = scmp.eq.s32.totalorder %s16, 1
      %p160 = scmp.ne.s32.totalorder %s155, %s157
      %p161 = scmp.eq.s32.totalorder %s16, 0
      %p162 = por %p160, %p161
      %p163 = scmp.ne.s32.totalorder %s155, %s157
      %p164 = scmp.eq.s32.totalorder %s21, 1
      %p165 = por %p163, %p164
      %p166 = scmp.ne.s32.totalorder %s157, %s158
      %p167 = scmp.eq.s32.totalorder %s21, 0
      %p168 = por %p166, %p167
      %p169 = scmp.ne.s32.totalorder %s157, %s158
      %p170 = scmp.eq.s32.totalorder %s22, 1
      %p171 = por %p169, %p170
      %p173 = scmp.ne.s32.totalorder %s158, %s172
      %p174 = scmp.eq.s32.totalorder %s22, 0
      %p175 = por %p173, %p174
      %s176 = ssub.s32 %s16, %s23
      %p177 = scmp.eq.s32.totalorder %s176, 0
      %s179 = sadd.s32 %s178, 1
      %s180 = scalar_select %p177, %s178, %s179
      %p183 = pneg %p177
      %p184 = scmp.eq.s32.totalorder %s16, 1
      %p185 = por %p183, %p184
      %p186 = scmp.ne.s32.totalorder %s178, %s181
      %p187 = scmp.eq.s32.totalorder %s16, 0
      %p188 = por %p186, %p187
      %p189 = scmp.ne.s32.totalorder %s178, %s181
      %p190 = scmp.eq.s32.totalorder %s21, 1
      %p191 = por %p189, %p190
      %p192 = scmp.ne.s32.totalorder %s181, %s182
      %p193 = scmp.eq.s32.totalorder %s21, 0
      %p194 = por %p192, %p193
      %p195 = scmp.ne.s32.totalorder %s181, %s182
      %p196 = scmp.eq.s32.totalorder %s22, 1
      %p197 = por %p195, %p196
      %p199 = scmp.ne.s32.totalorder %s182, %s198
      %p200 = scmp.eq.s32.totalorder %s22, 0
      %p201 = por %p199, %p200
      %p202 = scmp.le.s32.totalorder 1, %s16
      %p203 = scmp.lt.s32.totalorder %s16, 3
      %p204 = pnand %p202, %p203
      %p205 = pneg %p204
      // Predicated region
      $region9: #{tpu_custom_call.1} parent=5 // pred_check
        _
      $region10: #{tpu_custom_call.1} parent=5 // pred_check_branch
        %207 = sbr.rel (%p204) target = $region12
      $region11: #{tpu_custom_call.1} parent=5 // pred_region
        %s208 = ssub.s32 %s16, 1
        // Predicated region
        $region13: #{tpu_custom_call.1} parent=11 // pred_check
          %p209 = pneg %p63
        $region14: #{tpu_custom_call.1} parent=11 // pred_check_branch
          %211 = sbr.rel (%p209) target = $region16
        $region15: #{tpu_custom_call.1} parent=11 // pred_region
          _
        $region16: #{tpu_custom_call.1} parent=11 // pred_fallthru
          _
        // Predicated region
        $region17: #{tpu_custom_call.1} parent=11 // pred_check
          %p212 = pneg %p84
        $region18: #{tpu_custom_call.1} parent=11 // pred_check_branch
          %214 = sbr.rel (%p212) target = $region20
        $region19: #{tpu_custom_call.1} parent=11 // pred_region
          _
        $region20: #{tpu_custom_call.1} parent=11 // pred_fallthru
          _
        // Predicated region
        $region21: #{tpu_custom_call.1} parent=11 // pred_check
          %p215 = pneg %p105
        $region22: #{tpu_custom_call.1} parent=11 // pred_check_branch
          %217 = sbr.rel (%p215) target = $region24
        $region23: #{tpu_custom_call.1} parent=11 // pred_region
          _
        $region24: #{tpu_custom_call.1} parent=11 // pred_fallthru
          _
        // Predicated region
        $region25: #{tpu_custom_call.1} parent=11 // pred_check
          %p218 = pneg %p126
        $region26: #{tpu_custom_call.1} parent=11 // pred_check_branch
          %220 = sbr.rel (%p218) target = $region28
        $region27: #{tpu_custom_call.1} parent=11 // pred_region
          _
        $region28: #{tpu_custom_call.1} parent=11 // pred_fallthru
          _
        // Predicated region
        $region29: #{tpu_custom_call.1} parent=11 // pred_check
          %p221 = pneg %p147
        $region30: #{tpu_custom_call.1} parent=11 // pred_check_branch
          %223 = sbr.rel (%p221) target = $region32
        $region31: #{tpu_custom_call.1} parent=11 // pred_region
          _
        $region32: #{tpu_custom_call.1} parent=11 // pred_fallthru
          _
        // Predicated region
        $region33: #{tpu_custom_call.1} parent=11 // pred_check
          %p224 = pneg %p168
        $region34: #{tpu_custom_call.1} parent=11 // pred_check_branch
          %226 = sbr.rel (%p224) target = $region36
        $region35: #{tpu_custom_call.1} parent=11 // pred_region
          _
        $region36: #{tpu_custom_call.1} parent=11 // pred_fallthru
          _
      $region12: #{tpu_custom_call.1} parent=5 // pred_fallthru
        _
      %p227 = scmp.lt.s32.totalorder %s16, 2
      // Predicated region
      $region37: #{tpu_custom_call.1} parent=5 // pred_check
        %p228 = pneg %p227
      $region38: #{tpu_custom_call.1} parent=5 // pred_check_branch
        %230 = sbr.rel (%p228) target = $region40
      $region39: #{tpu_custom_call.1} parent=5 // pred_region
        // Predicated region
        $region41: #{tpu_custom_call.1} parent=39 // pred_check
          %p231 = pneg %p36
        $region42: #{tpu_custom_call.1} parent=39 // pred_check_branch
          %233 = sbr.rel (%p231) target = $region44
        $region43: #{tpu_custom_call.1} parent=39 // pred_region
          %s234 = smul.u32 32, %s16
          %p235 = scmp.lt.s32.totalorder %s234, 63
          %s236 = scalar_select %p235, %s234, 63
          %s237 = smul.addr %s236, 8
          %s238 = scalar_lea.vmem %s0, %s237
          %s239 = smul.u32 32, %s16
        $region44: #{tpu_custom_call.1} parent=39 // pred_fallthru
          _
      $region40: #{tpu_custom_call.1} parent=5 // pred_fallthru
        _
      %p240 = scmp.le.s32.totalorder 1, %s16
      %p241 = scmp.lt.s32.totalorder %s16, 3
      %p242 = pnand %p240, %p241
      %p243 = pneg %p242
      // Predicated region
      $region45: #{tpu_custom_call.1} parent=5 // pred_check
        _
      $region46: #{tpu_custom_call.1} parent=5 // pred_check_branch
        %245 = sbr.rel (%p242) target = $region48
      $region47: #{tpu_custom_call.1} parent=5 // pred_region
        %s246 = ssub.s32 %s16, 1
        %s247 = smul.u32 32, %s21
        %p248 = scmp.lt.s32.totalorder %s247, 63
        %s249 = scalar_select %p248, %s247, 63
        %s250 = smul.addr %s249, 8
        %s251 = scalar_lea.vmem %s0, %s250
        %p252 = pneg %p42
        %p253 = pneg %p39
        %p254 = pneg %p63
        %p255 = pneg %p60
        %p256 = pneg %p84
        %p257 = pneg %p81
        %p258 = pneg %p105
        %p259 = pneg %p102
        %p260 = pneg %p126
        %p261 = pneg %p123
        %p262 = pneg %p147
        %p263 = pneg %p144
        %p264 = pneg %p168
        %p265 = pneg %p165
        %p266 = pneg %p194
        %p267 = pneg %p191
        %s268 = sand.u32 %s181, 1
        %s269 = scalar_lea.sflag [#allocation3], %s268
        %s270 = sand.u32 %s181, 1
        %s271 = smul.addr %s270, 256
        %s272 = scalar_lea.vmem [#allocation2], %s271
        %s273 = smul.u32 32, %s21
        %p274 = scmp.lt.s32.totalorder %s273, 63
        %s275 = scalar_select %p274, %s273, 63
        %s276 = smul.addr %s275, 8
        %s277 = scalar_lea.vmem %s0, %s276
        %s278 = smul.u32 32, %s21
        %s279 = smul.u32 32, %s21
        %v280 = vld [vmem:[%s2] sm:$0x1]
        %v281 = vld [vmem:[%s4] sm:$0x1]
        %v282 = vld [vmem:[%s5] sm:$0x1]
        %v283 = vld [vmem:[%s6] sm:$0x1]
        %v284 = vld [vmem:[%s277] sm:$0xff]
        %v285 = vld [vmem:[%s277 + $0x8] sm:$0xff]
        %v286 = vld [vmem:[%s277 + $0x10] sm:$0xff]
        %v287 = vld [vmem:[%s277 + $0x18] sm:$0xff]
        %v288 = vld [vmem:[%s277 + $0x20] sm:$0xff]
        %v289 = vld [vmem:[%s277 + $0x28] sm:$0xff]
        %v290 = vld [vmem:[%s277 + $0x30] sm:$0xff]
        %v291 = vld [vmem:[%s277 + $0x38] sm:$0xff]
        %v292 = vld [vmem:[%s277 + $0x40] sm:$0xff]
        %v293 = vld [vmem:[%s277 + $0x48] sm:$0xff]
        %v294 = vld [vmem:[%s277 + $0x50] sm:$0xff]
        %v295 = vld [vmem:[%s277 + $0x58] sm:$0xff]
        %v296 = vld [vmem:[%s277 + $0x60] sm:$0xff]
        %v297 = vld [vmem:[%s277 + $0x68] sm:$0xff]
        %v298 = vld [vmem:[%s277 + $0x70] sm:$0xff]
        %v299 = vld [vmem:[%s277 + $0x78] sm:$0xff]
        %v300 = vld [vmem:[%s277 + $0x80] sm:$0xff]
        %v301 = vld [vmem:[%s277 + $0x88] sm:$0xff]
        %v302 = vld [vmem:[%s277 + $0x90] sm:$0xff]
        %v303 = vld [vmem:[%s277 + $0x98] sm:$0xff]
        %v304 = vld [vmem:[%s277 + $0xa0] sm:$0xff]
        %v305 = vld [vmem:[%s277 + $0xa8] sm:$0xff]
        %v306 = vld [vmem:[%s277 + $0xb0] sm:$0xff]
        %v307 = vld [vmem:[%s277 + $0xb8] sm:$0xff]
        %v308 = vld [vmem:[%s277 + $0xc0] sm:$0xff]
        %v309 = vld [vmem:[%s277 + $0xc8] sm:$0xff]
        %v310 = vld [vmem:[%s277 + $0xd0] sm:$0xff]
        %v311 = vld [vmem:[%s277 + $0xd8] sm:$0xff]
        %v312 = vld [vmem:[%s277 + $0xe0] sm:$0xff]
        %v313 = vld [vmem:[%s277 + $0xe8] sm:$0xff]
        %v314 = vld [vmem:[%s277 + $0xf0] sm:$0xff]
        %v315 = vld [vmem:[%s277 + $0xf8] sm:$0xff]
        %v316 = vld [vmem:[%s1] sm:$0xff]
        %v317 = vld [vmem:[%s1 + $0x8] sm:$0xff]
        %v318 = vld [vmem:[%s1 + $0x10] sm:$0xff]
        %v319 = vld [vmem:[%s1 + $0x18] sm:$0xff]
        %v320 = vld [vmem:[%s1 + $0x20] sm:$0xff]
        %v321 = vld [vmem:[%s1 + $0x28] sm:$0xff]
        %v322 = vld [vmem:[%s1 + $0x30] sm:$0xff]
        %v323 = vld [vmem:[%s1 + $0x38] sm:$0xff]
        %v325 = vlaneseq
        %v326 = vshrl.u32 %v325, 7
        %v327 = vsub.s32 0, %v326
        %v328 = vrot.slane %v280, %v327
        %vm330 = vcmask 523264
        %v332 = vsel %vm330, %v284, 0
        %v335 = vsel %vm330, %v285, 0
        %v338 = vsel %vm330, %v286, 0
        %v341 = vsel %vm330, %v287, 0
        %v344 = vsel %vm330, %v288, 0
        %v347 = vsel %vm330, %v289, 0
        %v350 = vsel %vm330, %v290, 0
        %v353 = vsel %vm330, %v291, 0
        %v356 = vsel %vm330, %v292, 0
        %v359 = vsel %vm330, %v293, 0
        %v362 = vsel %vm330, %v294, 0
        %v365 = vsel %vm330, %v295, 0
        %v368 = vsel %vm330, %v296, 0
        %v371 = vsel %vm330, %v297, 0
        %v374 = vsel %vm330, %v298, 0
        %v377 = vsel %vm330, %v299, 0
        %v380 = vsel %vm330, %v300, 0
        %v383 = vsel %vm330, %v301, 0
        %v386 = vsel %vm330, %v302, 0
        %v389 = vsel %vm330, %v303, 0
        %v392 = vsel %vm330, %v304, 0
        %v395 = vsel %vm330, %v305, 0
        %v398 = vsel %vm330, %v306, 0
        %v401 = vsel %vm330, %v307, 0
        %v404 = vsel %vm330, %v308, 0
        %v407 = vsel %vm330, %v309, 0
        %v410 = vsel %vm330, %v310, 0
        %v413 = vsel %vm330, %v311, 0
        %v416 = vsel %vm330, %v312, 0
        %v419 = vsel %vm330, %v313, 0
        %v422 = vsel %vm330, %v314, 0
        %v425 = vsel %vm330, %v315, 0
        %427 = vmatprep.subr.mxu0 0.0
        %428 = vmatpush1.msra.mxu0 %v316
        %429 = vmatprep.subr.mxu0 0.0
        %430 = vmatpush1.msra.mxu0 %v317
        %431 = vmatprep.subr.mxu0 0.0
        %432 = vmatpush1.msra.mxu0 %v318
        %433 = vmatprep.subr.mxu0 0.0
        %434 = vmatpush1.msra.mxu0 %v319
        %435 = vmatprep.subr.mxu0 0.0
        %436 = vmatpush1.msra.mxu0 %v320
        %437 = vmatprep.subr.mxu0 0.0
        %438 = vmatpush1.msra.mxu0 %v321
        %439 = vmatprep.subr.mxu0 0.0
        %440 = vmatpush1.msra.mxu0 %v322
        %441 = vmatprep.subr.mxu0 0.0
        %442 = vmatpush1.msra.mxu0 %v323
        %443 = vmatprep.subr.mxu0 0.0
        %444 = vmatpush1.msra.mxu0 0.0
        %445 = vmatprep.subr.mxu0 0.0
        %446 = vmatpush1.msra.mxu0 0.0
        %447 = vmatprep.subr.mxu0 0.0
        %448 = vmatpush1.msra.mxu0 0.0
        %449 = vmatprep.subr.mxu0 0.0
        %450 = vmatpush1.msra.mxu0 0.0
        %451 = vmatprep.subr.mxu0 0.0
        %452 = vmatpush1.msra.mxu0 0.0
        %453 = vmatprep.subr.mxu0 0.0
        %454 = vmatpush1.msra.mxu0 0.0
        %455 = vmatprep.subr.mxu0 0.0
        %456 = vmatpush1.msra.mxu0 0.0
        %457 = vmatprep.subr.mxu0 0.0
        %458 = vmatpush1.msra.mxu0 0.0
        %459 = vmatprep.subr.mxu0 0.0
        %460 = vmatpush1.msra.mxu0 0.0
        %461 = vmatprep.subr.mxu0 0.0
        %462 = vmatpush1.msra.mxu0 0.0
        %463 = vmatprep.subr.mxu0 0.0
        %464 = vmatpush1.msra.mxu0 0.0
        %465 = vmatprep.subr.mxu0 0.0
        %466 = vmatpush1.msra.mxu0 0.0
        %467 = vmatprep.subr.mxu0 0.0
        %468 = vmatpush1.msra.mxu0 0.0
        %469 = vmatprep.subr.mxu0 0.0
        %470 = vmatpush1.msra.mxu0 0.0
        %471 = vmatprep.subr.mxu0 0.0
        %472 = vmatpush1.msra.mxu0 0.0
        %473 = vmatprep.subr.mxu0 0.0
        %474 = vmatpush1.msra.mxu0 0.0
        %475 = vmatprep.subr.mxu0 0.0
        %476 = vmatpush1.msra.mxu0 0.0
        %477 = vmatprep.subr.mxu0 0.0
        %478 = vmatpush1.msra.mxu0 0.0
        %479 = vmatprep.subr.mxu0 0.0
        %480 = vmatpush1.msra.mxu0 0.0
        %481 = vmatprep.subr.mxu0 0.0
        %482 = vmatpush1.msra.mxu0 0.0
        %483 = vmatprep.subr.mxu0 0.0
        %484 = vmatpush1.msra.mxu0 0.0
        %485 = vmatprep.subr.mxu0 0.0
        %486 = vmatpush1.msra.mxu0 0.0
        %487 = vmatprep.subr.mxu0 0.0
        %488 = vmatpush1.msra.mxu0 0.0
        %489 = vmatprep.subr.mxu0 0.0
        %490 = vmatpush1.msra.mxu0 0.0
        %491 = vmatprep.mubr.f32.mxu0 0.0
        %492 = vmatmul.mubr.f32.gmra.mrb[0].mxu0 %v332
        %v493 = vpop.f32.mrb[0].mxu0
        %v494 = vadd.f32 %v328, %v493
        %v495 = vpop.f32.mrb[0].mxu0
        %496 = vmatprep.mubr.f32.mxu0 0.0
        %497 = vmatmul.mubr.f32.gmra.mrb[0].mxu0 %v335
        %v498 = vpop.f32.mrb[0].mxu0
        %v499 = vadd.f32 %v328, %v498
        %v500 = vpop.f32.mrb[0].mxu0
        %501 = vmatprep.mubr.f32.mxu0 0.0
        %502 = vmatmul.mubr.f32.gmra.mrb[0].mxu0 %v338
        %v503 = vpop.f32.mrb[0].mxu0
        %v504 = vadd.f32 %v328, %v503
        %v505 = vpop.f32.mrb[0].mxu0
        %506 = vmatprep.mubr.f32.mxu0 0.0
        %507 = vmatmul.mubr.f32.gmra.mrb[0].mxu0 %v341
        %v508 = vpop.f32.mrb[0].mxu0
        %v509 = vadd.f32 %v328, %v508
        %v510 = vpop.f32.mrb[0].mxu0
        %511 = vmatprep.mubr.f32.mxu0 0.0
        %512 = vmatmul.mubr.f32.gmra.mrb[0].mxu0 %v344
        %v513 = vpop.f32.mrb[0].mxu0
        %v514 = vadd.f32 %v328, %v513
        %v515 = vpop.f32.mrb[0].mxu0
        %516 = vmatprep.mubr.f32.mxu0 0.0
        %517 = vmatmul.mubr.f32.gmra.mrb[0].mxu0 %v347
        %v518 = vpop.f32.mrb[0].mxu0
        %v519 = vadd.f32 %v328, %v518
        %v520 = vpop.f32.mrb[0].mxu0
        %521 = vmatprep.mubr.f32.mxu0 0.0
        %522 = vmatmul.mubr.f32.gmra.mrb[0].mxu0 %v350
        %v523 = vpop.f32.mrb[0].mxu0
        %v524 = vadd.f32 %v328, %v523
        %v525 = vpop.f32.mrb[0].mxu0
        %526 = vmatprep.mubr.f32.mxu0 0.0
        %527 = vmatmul.mubr.f32.gmra.mrb[0].mxu0 %v353
        %v528 = vpop.f32.mrb[0].mxu0
        %v529 = vadd.f32 %v328, %v528
        %v530 = vpop.f32.mrb[0].mxu0
        %531 = vmatprep.mubr.f32.mxu0 0.0
        %532 = vmatmul.mubr.f32.gmra.mrb[0].mxu0 %v356
        %v533 = vpop.f32.mrb[0].mxu0
        %v534 = vadd.f32 %v328, %v533
        %v535 = vpop.f32.mrb[0].mxu0
        %536 = vmatprep.mubr.f32.mxu0 0.0
        %537 = vmatmul.mubr.f32.gmra.mrb[0].mxu0 %v359
        %v538 = vpop.f32.mrb[0].mxu0
        %v539 = vadd.f32 %v328, %v538
        %v540 = vpop.f32.mrb[0].mxu0
        %541 = vmatprep.mubr.f32.mxu0 0.0
        %542 = vmatmul.mubr.f32.gmra.mrb[0].mxu0 %v362
        %v543 = vpop.f32.mrb[0].mxu0
        %v544 = vadd.f32 %v328, %v543
        %v545 = vpop.f32.mrb[0].mxu0
        %546 = vmatprep.mubr.f32.mxu0 0.0
        %547 = vmatmul.mubr.f32.gmra.mrb[0].mxu0 %v365
        %v548 = vpop.f32.mrb[0].mxu0
        %v549 = vadd.f32 %v328, %v548
        %v550 = vpop.f32.mrb[0].mxu0
        %551 = vmatprep.mubr.f32.mxu0 0.0
        %552 = vmatmul.mubr.f32.gmra.mrb[0].mxu0 %v368
        %v553 = vpop.f32.mrb[0].mxu0
        %v554 = vadd.f32 %v328, %v553
        %v555 = vpop.f32.mrb[0].mxu0
        %556 = vmatprep.mubr.f32.mxu0 0.0
        %557 = vmatmul.mubr.f32.gmra.mrb[0].mxu0 %v371
        %v558 = vpop.f32.mrb[0].mxu0
        %v559 = vadd.f32 %v328, %v558
        %v560 = vpop.f32.mrb[0].mxu0
        %561 = vmatprep.mubr.f32.mxu0 0.0
        %562 = vmatmul.mubr.f32.gmra.mrb[0].mxu0 %v374
        %v563 = vpop.f32.mrb[0].mxu0
        %v564 = vadd.f32 %v328, %v563
        %v565 = vpop.f32.mrb[0].mxu0
        %566 = vmatprep.mubr.f32.mxu0 0.0
        %567 = vmatmul.mubr.f32.gmra.mrb[0].mxu0 %v377
        %v568 = vpop.f32.mrb[0].mxu0
        %v569 = vadd.f32 %v328, %v568
        %v570 = vpop.f32.mrb[0].mxu0
        %571 = vmatprep.mubr.f32.mxu0 0.0
        %572 = vmatmul.mubr.f32.gmra.mrb[0].mxu0 %v380
        %v573 = vpop.f32.mrb[0].mxu0
        %v574 = vadd.f32 %v328, %v573
        %v575 = vpop.f32.mrb[0].mxu0
        %576 = vmatprep.mubr.f32.mxu0 0.0
        %577 = vmatmul.mubr.f32.gmra.mrb[0].mxu0 %v383
        %v578 = vpop.f32.mrb[0].mxu0
        %v579 = vadd.f32 %v328, %v578
        %v580 = vpop.f32.mrb[0].mxu0
        %581 = vmatprep.mubr.f32.mxu0 0.0
        %582 = vmatmul.mubr.f32.gmra.mrb[0].mxu0 %v386
        %v583 = vpop.f32.mrb[0].mxu0
        %v584 = vadd.f32 %v328, %v583
        %v585 = vpop.f32.mrb[0].mxu0
        %586 = vmatprep.mubr.f32.mxu0 0.0
        %587 = vmatmul.mubr.f32.gmra.mrb[0].mxu0 %v389
        %v588 = vpop.f32.mrb[0].mxu0
        %v589 = vadd.f32 %v328, %v588
        %v590 = vpop.f32.mrb[0].mxu0
        %591 = vmatprep.mubr.f32.mxu0 0.0
        %592 = vmatmul.mubr.f32.gmra.mrb[0].mxu0 %v392
        %v593 = vpop.f32.mrb[0].mxu0
        %v594 = vadd.f32 %v328, %v593
        %v595 = vpop.f32.mrb[0].mxu0
        %596 = vmatprep.mubr.f32.mxu0 0.0
        %597 = vmatmul.mubr.f32.gmra.mrb[0].mxu0 %v395
        %v598 = vpop.f32.mrb[0].mxu0
        %v599 = vadd.f32 %v328, %v598
        %v600 = vpop.f32.mrb[0].mxu0
        %601 = vmatprep.mubr.f32.mxu0 0.0
        %602 = vmatmul.mubr.f32.gmra.mrb[0].mxu0 %v398
        %v603 = vpop.f32.mrb[0].mxu0
        %v604 = vadd.f32 %v328, %v603
        %v605 = vpop.f32.mrb[0].mxu0
        %606 = vmatprep.mubr.f32.mxu0 0.0
        %607 = vmatmul.mubr.f32.gmra.mrb[0].mxu0 %v401
        %v608 = vpop.f32.mrb[0].mxu0
        %v609 = vadd.f32 %v328, %v608
        %v610 = vpop.f32.mrb[0].mxu0
        %611 = vmatprep.mubr.f32.mxu0 0.0
        %612 = vmatmul.mubr.f32.gmra.mrb[0].mxu0 %v404
        %v613 = vpop.f32.mrb[0].mxu0
        %v614 = vadd.f32 %v328, %v613
        %v615 = vpop.f32.mrb[0].mxu0
        %616 = vmatprep.mubr.f32.mxu0 0.0
        %617 = vmatmul.mubr.f32.gmra.mrb[0].mxu0 %v407
        %v618 = vpop.f32.mrb[0].mxu0
        %v619 = vadd.f32 %v328, %v618
        %v620 = vpop.f32.mrb[0].mxu0
        %621 = vmatprep.mubr.f32.mxu0 0.0
        %622 = vmatmul.mubr.f32.gmra.mrb[0].mxu0 %v410
        %v623 = vpop.f32.mrb[0].mxu0
        %v624 = vadd.f32 %v328, %v623
        %v625 = vpop.f32.mrb[0].mxu0
        %626 = vmatprep.mubr.f32.mxu0 0.0
        %627 = vmatmul.mubr.f32.gmra.mrb[0].mxu0 %v413
        %v628 = vpop.f32.mrb[0].mxu0
        %v629 = vadd.f32 %v328, %v628
        %v630 = vpop.f32.mrb[0].mxu0
        %631 = vmatprep.mubr.f32.mxu0 0.0
        %632 = vmatmul.mubr.f32.gmra.mrb[0].mxu0 %v416
        %v633 = vpop.f32.mrb[0].mxu0
        %v634 = vadd.f32 %v328, %v633
        %v635 = vpop.f32.mrb[0].mxu0
        %636 = vmatprep.mubr.f32.mxu0 0.0
        %637 = vmatmul.mubr.f32.gmra.mrb[0].mxu0 %v419
        %v638 = vpop.f32.mrb[0].mxu0
        %v639 = vadd.f32 %v328, %v638
        %v640 = vpop.f32.mrb[0].mxu0
        %641 = vmatprep.mubr.f32.mxu0 0.0
        %642 = vmatmul.mubr.f32.gmra.mrb[0].mxu0 %v422
        %v643 = vpop.f32.mrb[0].mxu0
        %v644 = vadd.f32 %v328, %v643
        %v645 = vpop.f32.mrb[0].mxu0
        %646 = vmatprep.mubr.f32.mxu0 0.0
        %647 = vmatmul.mubr.f32.gmra.mrb[0].mxu0 %v425
        %v648 = vpop.f32.mrb[0].mxu0
        %v649 = vadd.f32 %v328, %v648
        %v650 = vpop.f32.mrb[0].mxu0
        %651 = vdwg.mxu0
        %v652 = vmul.f32 %v494, 0.5
        %v653 = vmul.f32 %v499, 0.5
        %v654 = vmul.f32 %v504, 0.5
        %v655 = vmul.f32 %v509, 0.5
        %v656 = vmul.f32 %v514, 0.5
        %v657 = vmul.f32 %v519, 0.5
        %v658 = vmul.f32 %v524, 0.5
        %v659 = vmul.f32 %v529, 0.5
        %v660 = vmul.f32 %v534, 0.5
        %v661 = vmul.f32 %v539, 0.5
        %v662 = vmul.f32 %v544, 0.5
        %v663 = vmul.f32 %v549, 0.5
        %v664 = vmul.f32 %v554, 0.5
        %v665 = vmul.f32 %v559, 0.5
        %v666 = vmul.f32 %v564, 0.5
        %v667 = vmul.f32 %v569, 0.5
        %v668 = vmul.f32 %v574, 0.5
        %v669 = vmul.f32 %v579, 0.5
        %v670 = vmul.f32 %v584, 0.5
        %v671 = vmul.f32 %v589, 0.5
        %v672 = vmul.f32 %v594, 0.5
        %v673 = vmul.f32 %v599, 0.5
        %v674 = vmul.f32 %v604, 0.5
        %v675 = vmul.f32 %v609, 0.5
        %v676 = vmul.f32 %v614, 0.5
        %v677 = vmul.f32 %v619, 0.5
        %v678 = vmul.f32 %v624, 0.5
        %v679 = vmul.f32 %v629, 0.5
        %v680 = vmul.f32 %v634, 0.5
        %v681 = vmul.f32 %v639, 0.5
        %v682 = vmul.f32 %v644, 0.5
        %v683 = vmul.f32 %v649, 0.5
        %v684 = vmul.f32 %v494, 0.70710677
        %v685 = vmul.f32 %v499, 0.70710677
        %v686 = vmul.f32 %v504, 0.70710677
        %v687 = vmul.f32 %v509, 0.70710677
        %v688 = vmul.f32 %v514, 0.70710677
        %v689 = vmul.f32 %v519, 0.70710677
        %v690 = vmul.f32 %v524, 0.70710677
        %v691 = vmul.f32 %v529, 0.70710677
        %v692 = vmul.f32 %v534, 0.70710677
        %v693 = vmul.f32 %v539, 0.70710677
        %v694 = vmul.f32 %v544, 0.70710677
        %v695 = vmul.f32 %v549, 0.70710677
        %v696 = vmul.f32 %v554, 0.70710677
        %v697 = vmul.f32 %v559, 0.70710677
        %v698 = vmul.f32 %v564, 0.70710677
        %v699 = vmul.f32 %v569, 0.70710677
        %v700 = vmul.f32 %v574, 0.70710677
        %v701 = vmul.f32 %v579, 0.70710677
        %v702 = vmul.f32 %v584, 0.70710677
        %v703 = vmul.f32 %v589, 0.70710677
        %v704 = vmul.f32 %v594, 0.70710677
        %v705 = vmul.f32 %v599, 0.70710677
        %v706 = vmul.f32 %v604, 0.70710677
        %v707 = vmul.f32 %v609, 0.70710677
        %v708 = vmul.f32 %v614, 0.70710677
        %v709 = vmul.f32 %v619, 0.70710677
        %v710 = vmul.f32 %v624, 0.70710677
        %v711 = vmul.f32 %v629, 0.70710677
        %v712 = vmul.f32 %v634, 0.70710677
        %v713 = vmul.f32 %v639, 0.70710677
        %v714 = vmul.f32 %v644, 0.70710677
        %v715 = vmul.f32 %v649, 0.70710677
        %v716 = verf.f32.pop %v684
        %v717 = verf.f32.pop %v685
        %v718 = verf.f32.pop %v686
        %v719 = verf.f32.pop %v687
        %v720 = verf.f32.pop %v688
        %v721 = verf.f32.pop %v689
        %v722 = verf.f32.pop %v690
        %v723 = verf.f32.pop %v691
        %v724 = verf.f32.pop %v692
        %v725 = verf.f32.pop %v693
        %v726 = verf.f32.pop %v694
        %v727 = verf.f32.pop %v695
        %v728 = verf.f32.pop %v696
        %v729 = verf.f32.pop %v697
        %v730 = verf.f32.pop %v698
        %v731 = verf.f32.pop %v699
        %v732 = verf.f32.pop %v700
        %v733 = verf.f32.pop %v701
        %v734 = verf.f32.pop %v702
        %v735 = verf.f32.pop %v703
        %v736 = verf.f32.pop %v704
        %v737 = verf.f32.pop %v705
        %v738 = verf.f32.pop %v706
        %v739 = verf.f32.pop %v707
        %v740 = verf.f32.pop %v708
        %v741 = verf.f32.pop %v709
        %v742 = verf.f32.pop %v710
        %v743 = verf.f32.pop %v711
        %v744 = verf.f32.pop %v712
        %v745 = verf.f32.pop %v713
        %v746 = verf.f32.pop %v714
        %v747 = verf.f32.pop %v715
        %v748 = vadd.f32 %v716, 1.0
        %v749 = vadd.f32 %v717, 1.0
        %v750 = vadd.f32 %v718, 1.0
        %v751 = vadd.f32 %v719, 1.0
        %v752 = vadd.f32 %v720, 1.0
        %v753 = vadd.f32 %v721, 1.0
        %v754 = vadd.f32 %v722, 1.0
        %v755 = vadd.f32 %v723, 1.0
        %v756 = vadd.f32 %v724, 1.0
        %v757 = vadd.f32 %v725, 1.0
        %v758 = vadd.f32 %v726, 1.0
        %v759 = vadd.f32 %v727, 1.0
        %v760 = vadd.f32 %v728, 1.0
        %v761 = vadd.f32 %v729, 1.0
        %v762 = vadd.f32 %v730, 1.0
        %v763 = vadd.f32 %v731, 1.0
        %v764 = vadd.f32 %v732, 1.0
        %v765 = vadd.f32 %v733, 1.0
        %v766 = vadd.f32 %v734, 1.0
        %v767 = vadd.f32 %v735, 1.0
        %v768 = vadd.f32 %v736, 1.0
        %v769 = vadd.f32 %v737, 1.0
        %v770 = vadd.f32 %v738, 1.0
        %v771 = vadd.f32 %v739, 1.0
        %v772 = vadd.f32 %v740, 1.0
        %v773 = vadd.f32 %v741, 1.0
        %v774 = vadd.f32 %v742, 1.0
        %v775 = vadd.f32 %v743, 1.0
        %v776 = vadd.f32 %v744, 1.0
        %v777 = vadd.f32 %v745, 1.0
        %v778 = vadd.f32 %v746, 1.0
        %v779 = vadd.f32 %v747, 1.0
        %v780 = vmul.f32 %v652, %v748
        %v781 = vmul.f32 %v653, %v749
        %v782 = vmul.f32 %v654, %v750
        %v783 = vmul.f32 %v655, %v751
        %v784 = vmul.f32 %v656, %v752
        %v785 = vmul.f32 %v657, %v753
        %v786 = vmul.f32 %v658, %v754
        %v787 = vmul.f32 %v659, %v755
        %v788 = vmul.f32 %v660, %v756
        %v789 = vmul.f32 %v661, %v757
        %v790 = vmul.f32 %v662, %v758
        %v791 = vmul.f32 %v663, %v759
        %v792 = vmul.f32 %v664, %v760
        %v793 = vmul.f32 %v665, %v761
        %v794 = vmul.f32 %v666, %v762
        %v795 = vmul.f32 %v667, %v763
        %v796 = vmul.f32 %v668, %v764
        %v797 = vmul.f32 %v669, %v765
        %v798 = vmul.f32 %v670, %v766
        %v799 = vmul.f32 %v671, %v767
        %v800 = vmul.f32 %v672, %v768
        %v801 = vmul.f32 %v673, %v769
        %v802 = vmul.f32 %v674, %v770
        %v803 = vmul.f32 %v675, %v771
        %v804 = vmul.f32 %v676, %v772
        %v805 = vmul.f32 %v677, %v773
        %v806 = vmul.f32 %v678, %v774
        %v807 = vmul.f32 %v679, %v775
        %v808 = vmul.f32 %v680, %v776
        %v809 = vmul.f32 %v681, %v777
        %v810 = vmul.f32 %v682, %v778
        %v811 = vmul.f32 %v683, %v779
        %v812 = vld [vmem:[%s3] sm:$0xff]
        %v813 = vld [vmem:[%s3 + $0x8] sm:$0xff]
        %v814 = vld [vmem:[%s3 + $0x10] sm:$0xff]
        %v815 = vld [vmem:[%s3 + $0x18] sm:$0xff]
        %v816 = vld [vmem:[%s3 + $0x20] sm:$0xff]
        %v817 = vld [vmem:[%s3 + $0x28] sm:$0xff]
        %v818 = vld [vmem:[%s3 + $0x30] sm:$0xff]
        %v819 = vld [vmem:[%s3 + $0x38] sm:$0xff]
        %v820 = vld [vmem:[%s3 + $0x40] sm:$0xff]
        %v821 = vld [vmem:[%s3 + $0x48] sm:$0xff]
        %v822 = vld [vmem:[%s3 + $0x50] sm:$0xff]
        %v823 = vld [vmem:[%s3 + $0x58] sm:$0xff]
        %v824 = vld [vmem:[%s3 + $0x60] sm:$0xff]
        %v825 = vld [vmem:[%s3 + $0x68] sm:$0xff]
        %v826 = vld [vmem:[%s3 + $0x70] sm:$0xff]
        %v827 = vld [vmem:[%s3 + $0x78] sm:$0xff]
        %v829 = vlaneseq
        %v830 = vshrl.u32 %v829, 7
        %v831 = vsub.s32 0, %v830
        %v832 = vrot.slane %v281, %v831
        %834 = vmatprep.subr.mxu0 0.0
        %835 = vmatpush1.msra.mxu0 %v812
        %836 = vmatprep.subr.mxu0 0.0
        %837 = vmatpush1.msra.mxu0 %v813
        %838 = vmatprep.subr.mxu0 0.0
        %839 = vmatpush1.msra.mxu0 %v814
        %840 = vmatprep.subr.mxu0 0.0
        %841 = vmatpush1.msra.mxu0 %v815
        %842 = vmatprep.subr.mxu0 0.0
        %843 = vmatpush1.msra.mxu0 %v816
        %844 = vmatprep.subr.mxu0 0.0
        %845 = vmatpush1.msra.mxu0 %v817
        %846 = vmatprep.subr.mxu0 0.0
        %847 = vmatpush1.msra.mxu0 %v818
        %848 = vmatprep.subr.mxu0 0.0
        %849 = vmatpush1.msra.mxu0 %v819
        %850 = vmatprep.subr.mxu0 0.0
        %851 = vmatpush1.msra.mxu0 %v820
        %852 = vmatprep.subr.mxu0 0.0
        %853 = vmatpush1.msra.mxu0 %v821
        %854 = vmatprep.subr.mxu0 0.0
        %855 = vmatpush1.msra.mxu0 %v822
        %856 = vmatprep.subr.mxu0 0.0
        %857 = vmatpush1.msra.mxu0 %v823
        %858 = vmatprep.subr.mxu0 0.0
        %859 = vmatpush1.msra.mxu0 %v824
        %860 = vmatprep.subr.mxu0 0.0
        %861 = vmatpush1.msra.mxu0 %v825
        %862 = vmatprep.subr.mxu0 0.0
        %863 = vmatpush1.msra.mxu0 %v826
        %864 = vmatprep.subr.mxu0 0.0
        %865 = vmatpush1.msra.mxu0 %v827
        %866 = vmatprep.subr.mxu0 0.0
        %867 = vmatpush1.msra.mxu0 0.0
        %868 = vmatprep.subr.mxu0 0.0
        %869 = vmatpush1.msra.mxu0 0.0
        %870 = vmatprep.subr.mxu0 0.0
        %871 = vmatpush1.msra.mxu0 0.0
        %872 = vmatprep.subr.mxu0 0.0
        %873 = vmatpush1.msra.mxu0 0.0
        %874 = vmatprep.subr.mxu0 0.0
        %875 = vmatpush1.msra.mxu0 0.0
        %876 = vmatprep.subr.mxu0 0.0
        %877 = vmatpush1.msra.mxu0 0.0
        %878 = vmatprep.subr.mxu0 0.0
        %879 = vmatpush1.msra.mxu0 0.0
        %880 = vmatprep.subr.mxu0 0.0
        %881 = vmatpush1.msra.mxu0 0.0
        %882 = vmatprep.subr.mxu0 0.0
        %883 = vmatpush1.msra.mxu0 0.0
        %884 = vmatprep.subr.mxu0 0.0
        %885 = vmatpush1.msra.mxu0 0.0
        %886 = vmatprep.subr.mxu0 0.0
        %887 = vmatpush1.msra.mxu0 0.0
        %888 = vmatprep.subr.mxu0 0.0
        %889 = vmatpush1.msra.mxu0 0.0
        %890 = vmatprep.subr.mxu0 0.0
        %891 = vmatpush1.msra.mxu0 0.0
        %892 = vmatprep.subr.mxu0 0.0
        %893 = vmatpush1.msra.mxu0 0.0
        %894 = vmatprep.subr.mxu0 0.0
        %895 = vmatpush1.msra.mxu0 0.0
        %896 = vmatprep.subr.mxu0 0.0
        %897 = vmatpush1.msra.mxu0 0.0
        %898 = vmatprep.mubr.f32.mxu0 0.0
        %899 = vmatmul.mubr.f32.gmra.mrb[0].mxu0 %v780
        %v900 = vpop.f32.mrb[0].mxu0
        %v901 = vadd.f32 %v832, %v900
        %v902 = vpop.f32.mrb[0].mxu0
        %903 = vmatprep.mubr.f32.mxu0 0.0
        %904 = vmatmul.mubr.f32.gmra.mrb[0].mxu0 %v781
        %v905 = vpop.f32.mrb[0].mxu0
        %v906 = vadd.f32 %v832, %v905
        %v907 = vpop.f32.mrb[0].mxu0
        %908 = vmatprep.mubr.f32.mxu0 0.0
        %909 = vmatmul.mubr.f32.gmra.mrb[0].mxu0 %v782
        %v910 = vpop.f32.mrb[0].mxu0
        %v911 = vadd.f32 %v832, %v910
        %v912 = vpop.f32.mrb[0].mxu0
        %913 = vmatprep.mubr.f32.mxu0 0.0
        %914 = vmatmul.mubr.f32.gmra.mrb[0].mxu0 %v783
        %v915 = vpop.f32.mrb[0].mxu0
        %v916 = vadd.f32 %v832, %v915
        %v917 = vpop.f32.mrb[0].mxu0
        %918 = vmatprep.mubr.f32.mxu0 0.0
        %919 = vmatmul.mubr.f32.gmra.mrb[0].mxu0 %v784
        %v920 = vpop.f32.mrb[0].mxu0
        %v921 = vadd.f32 %v832, %v920
        %v922 = vpop.f32.mrb[0].mxu0
        %923 = vmatprep.mubr.f32.mxu0 0.0
        %924 = vmatmul.mubr.f32.gmra.mrb[0].mxu0 %v785
        %v925 = vpop.f32.mrb[0].mxu0
        %v926 = vadd.f32 %v832, %v925
        %v927 = vpop.f32.mrb[0].mxu0
        %928 = vmatprep.mubr.f32.mxu0 0.0
        %929 = vmatmul.mubr.f32.gmra.mrb[0].mxu0 %v786
        %v930 = vpop.f32.mrb[0].mxu0
        %v931 = vadd.f32 %v832, %v930
        %v932 = vpop.f32.mrb[0].mxu0
        %933 = vmatprep.mubr.f32.mxu0 0.0
        %934 = vmatmul.mubr.f32.gmra.mrb[0].mxu0 %v787
        %v935 = vpop.f32.mrb[0].mxu0
        %v936 = vadd.f32 %v832, %v935
        %v937 = vpop.f32.mrb[0].mxu0
        %938 = vmatprep.mubr.f32.mxu0 0.0
        %939 = vmatmul.mubr.f32.gmra.mrb[0].mxu0 %v788
        %v940 = vpop.f32.mrb[0].mxu0
        %v941 = vadd.f32 %v832, %v940
        %v942 = vpop.f32.mrb[0].mxu0
        %943 = vmatprep.mubr.f32.mxu0 0.0
        %944 = vmatmul.mubr.f32.gmra.mrb[0].mxu0 %v789
        %v945 = vpop.f32.mrb[0].mxu0
        %v946 = vadd.f32 %v832, %v945
        %v947 = vpop.f32.mrb[0].mxu0
        %948 = vmatprep.mubr.f32.mxu0 0.0
        %949 = vmatmul.mubr.f32.gmra.mrb[0].mxu0 %v790
        %v950 = vpop.f32.mrb[0].mxu0
        %v951 = vadd.f32 %v832, %v950
        %v952 = vpop.f32.mrb[0].mxu0
        %953 = vmatprep.mubr.f32.mxu0 0.0
        %954 = vmatmul.mubr.f32.gmra.mrb[0].mxu0 %v791
        %v955 = vpop.f32.mrb[0].mxu0
        %v956 = vadd.f32 %v832, %v955
        %v957 = vpop.f32.mrb[0].mxu0
        %958 = vmatprep.mubr.f32.mxu0 0.0
        %959 = vmatmul.mubr.f32.gmra.mrb[0].mxu0 %v792
        %v960 = vpop.f32.mrb[0].mxu0
        %v961 = vadd.f32 %v832, %v960
        %v962 = vpop.f32.mrb[0].mxu0
        %963 = vmatprep.mubr.f32.mxu0 0.0
        %964 = vmatmul.mubr.f32.gmra.mrb[0].mxu0 %v793
        %v965 = vpop.f32.mrb[0].mxu0
        %v966 = vadd.f32 %v832, %v965
        %v967 = vpop.f32.mrb[0].mxu0
        %968 = vmatprep.mubr.f32.mxu0 0.0
        %969 = vmatmul.mubr.f32.gmra.mrb[0].mxu0 %v794
        %v970 = vpop.f32.mrb[0].mxu0
        %v971 = vadd.f32 %v832, %v970
        %v972 = vpop.f32.mrb[0].mxu0
        %973 = vmatprep.mubr.f32.mxu0 0.0
        %974 = vmatmul.mubr.f32.gmra.mrb[0].mxu0 %v795
        %v975 = vpop.f32.mrb[0].mxu0
        %v976 = vadd.f32 %v832, %v975
        %v977 = vpop.f32.mrb[0].mxu0
        %978 = vmatprep.mubr.f32.mxu0 0.0
        %979 = vmatmul.mubr.f32.gmra.mrb[0].mxu0 %v796
        %v980 = vpop.f32.mrb[0].mxu0
        %v981 = vadd.f32 %v832, %v980
        %v982 = vpop.f32.mrb[0].mxu0
        %983 = vmatprep.mubr.f32.mxu0 0.0
        %984 = vmatmul.mubr.f32.gmra.mrb[0].mxu0 %v797
        %v985 = vpop.f32.mrb[0].mxu0
        %v986 = vadd.f32 %v832, %v985
        %v987 = vpop.f32.mrb[0].mxu0
        %988 = vmatprep.mubr.f32.mxu0 0.0
        %989 = vmatmul.mubr.f32.gmra.mrb[0].mxu0 %v798
        %v990 = vpop.f32.mrb[0].mxu0
        %v991 = vadd.f32 %v832, %v990
        %v992 = vpop.f32.mrb[0].mxu0
        %993 = vmatprep.mubr.f32.mxu0 0.0
        %994 = vmatmul.mubr.f32.gmra.mrb[0].mxu0 %v799
        %v995 = vpop.f32.mrb[0].mxu0
        %v996 = vadd.f32 %v832, %v995
        %v997 = vpop.f32.mrb[0].mxu0
        %998 = vmatprep.mubr.f32.mxu0 0.0
        %999 = vmatmul.mubr.f32.gmra.mrb[0].mxu0 %v800
        %v1000 = vpop.f32.mrb[0].mxu0
        %v1001 = vadd.f32 %v832, %v1000
        %v1002 = vpop.f32.mrb[0].mxu0
        %1003 = vmatprep.mubr.f32.mxu0 0.0
        %1004 = vmatmul.mubr.f32.gmra.mrb[0].mxu0 %v801
        %v1005 = vpop.f32.mrb[0].mxu0
        %v1006 = vadd.f32 %v832, %v1005
        %v1007 = vpop.f32.mrb[0].mxu0
        %1008 = vmatprep.mubr.f32.mxu0 0.0
        %1009 = vmatmul.mubr.f32.gmra.mrb[0].mxu0 %v802
        %v1010 = vpop.f32.mrb[0].mxu0
        %v1011 = vadd.f32 %v832, %v1010
        %v1012 = vpop.f32.mrb[0].mxu0
        %1013 = vmatprep.mubr.f32.mxu0 0.0
        %1014 = vmatmul.mubr.f32.gmra.mrb[0].mxu0 %v803
        %v1015 = vpop.f32.mrb[0].mxu0
        %v1016 = vadd.f32 %v832, %v1015
        %v1017 = vpop.f32.mrb[0].mxu0
        %1018 = vmatprep.mubr.f32.mxu0 0.0
        %1019 = vmatmul.mubr.f32.gmra.mrb[0].mxu0 %v804
        %v1020 = vpop.f32.mrb[0].mxu0
        %v1021 = vadd.f32 %v832, %v1020
        %v1022 = vpop.f32.mrb[0].mxu0
        %1023 = vmatprep.mubr.f32.mxu0 0.0
        %1024 = vmatmul.mubr.f32.gmra.mrb[0].mxu0 %v805
        %v1025 = vpop.f32.mrb[0].mxu0
        %v1026 = vadd.f32 %v832, %v1025
        %v1027 = vpop.f32.mrb[0].mxu0
        %1028 = vmatprep.mubr.f32.mxu0 0.0
        %1029 = vmatmul.mubr.f32.gmra.mrb[0].mxu0 %v806
        %v1030 = vpop.f32.mrb[0].mxu0
        %v1031 = vadd.f32 %v832, %v1030
        %v1032 = vpop.f32.mrb[0].mxu0
        %1033 = vmatprep.mubr.f32.mxu0 0.0
        %1034 = vmatmul.mubr.f32.gmra.mrb[0].mxu0 %v807
        %v1035 = vpop.f32.mrb[0].mxu0
        %v1036 = vadd.f32 %v832, %v1035
        %v1037 = vpop.f32.mrb[0].mxu0
        %1038 = vmatprep.mubr.f32.mxu0 0.0
        %1039 = vmatmul.mubr.f32.gmra.mrb[0].mxu0 %v808
        %v1040 = vpop.f32.mrb[0].mxu0
        %v1041 = vadd.f32 %v832, %v1040
        %v1042 = vpop.f32.mrb[0].mxu0
        %1043 = vmatprep.mubr.f32.mxu0 0.0
        %1044 = vmatmul.mubr.f32.gmra.mrb[0].mxu0 %v809
        %v1045 = vpop.f32.mrb[0].mxu0
        %v1046 = vadd.f32 %v832, %v1045
        %v1047 = vpop.f32.mrb[0].mxu0
        %1048 = vmatprep.mubr.f32.mxu0 0.0
        %1049 = vmatmul.mubr.f32.gmra.mrb[0].mxu0 %v810
        %v1050 = vpop.f32.mrb[0].mxu0
        %v1051 = vadd.f32 %v832, %v1050
        %v1052 = vpop.f32.mrb[0].mxu0
        %1053 = vmatprep.mubr.f32.mxu0 0.0
        %1054 = vmatmul.mubr.f32.gmra.mrb[0].mxu0 %v811
        %v1055 = vpop.f32.mrb[0].mxu0
        %v1056 = vadd.f32 %v832, %v1055
        %v1057 = vpop.f32.mrb[0].mxu0
        %1058 = vdwg.mxu0
        %v1059 = vadd.f32 %v901, %v494
        %v1060 = vadd.f32 %v906, %v499
        %v1061 = vadd.f32 %v911, %v504
        %v1062 = vadd.f32 %v916, %v509
        %v1063 = vadd.f32 %v921, %v514
        %v1064 = vadd.f32 %v926, %v519
        %v1065 = vadd.f32 %v931, %v524
        %v1066 = vadd.f32 %v936, %v529
        %v1067 = vadd.f32 %v941, %v534
        %v1068 = vadd.f32 %v946, %v539
        %v1069 = vadd.f32 %v951, %v544
        %v1070 = vadd.f32 %v956, %v549
        %v1071 = vadd.f32 %v961, %v554
        %v1072 = vadd.f32 %v966, %v559
        %v1073 = vadd.f32 %v971, %v564
        %v1074 = vadd.f32 %v976, %v569
        %v1075 = vadd.f32 %v981, %v574
        %v1076 = vadd.f32 %v986, %v579
        %v1077 = vadd.f32 %v991, %v584
        %v1078 = vadd.f32 %v996, %v589
        %v1079 = vadd.f32 %v1001, %v594
        %v1080 = vadd.f32 %v1006, %v599
        %v1081 = vadd.f32 %v1011, %v604
        %v1082 = vadd.f32 %v1016, %v609
        %v1083 = vadd.f32 %v1021, %v614
        %v1084 = vadd.f32 %v1026, %v619
        %v1085 = vadd.f32 %v1031, %v624
        %v1086 = vadd.f32 %v1036, %v629
        %v1087 = vadd.f32 %v1041, %v634
        %v1088 = vadd.f32 %v1046, %v639
        %v1089 = vadd.f32 %v1051, %v644
        %v1090 = vadd.f32 %v1056, %v649
        %1091 = vadd.xlane.f32.xlu0 %v1059
        %v1092 = vpop.xlane.xlu0 %1091
        %1093 = vadd.xlane.f32.xlu0 %v1060
        %v1094 = vpop.xlane.xlu0 %1093
        %1095 = vadd.xlane.f32.xlu0 %v1061
        %v1096 = vpop.xlane.xlu0 %1095
        %1097 = vadd.xlane.f32.xlu0 %v1062
        %v1098 = vpop.xlane.xlu0 %1097
        %1099 = vadd.xlane.f32.xlu0 %v1063
        %v1100 = vpop.xlane.xlu0 %1099
        %1101 = vadd.xlane.f32.xlu0 %v1064
        %v1102 = vpop.xlane.xlu0 %1101
        %1103 = vadd.xlane.f32.xlu0 %v1065
        %v1104 = vpop.xlane.xlu0 %1103
        %1105 = vadd.xlane.f32.xlu0 %v1066
        %v1106 = vpop.xlane.xlu0 %1105
        %1107 = vadd.xlane.f32.xlu0 %v1067
        %v1108 = vpop.xlane.xlu0 %1107
        %1109 = vadd.xlane.f32.xlu0 %v1068
        %v1110 = vpop.xlane.xlu0 %1109
        %1111 = vadd.xlane.f32.xlu0 %v1069
        %v1112 = vpop.xlane.xlu0 %1111
        %1113 = vadd.xlane.f32.xlu0 %v1070
        %v1114 = vpop.xlane.xlu0 %1113
        %1115 = vadd.xlane.f32.xlu0 %v1071
        %v1116 = vpop.xlane.xlu0 %1115
        %1117 = vadd.xlane.f32.xlu0 %v1072
        %v1118 = vpop.xlane.xlu0 %1117
        %1119 = vadd.xlane.f32.xlu0 %v1073
        %v1120 = vpop.xlane.xlu0 %1119
        %1121 = vadd.xlane.f32.xlu0 %v1074
        %v1122 = vpop.xlane.xlu0 %1121
        %1123 = vadd.xlane.f32.xlu0 %v1075
        %v1124 = vpop.xlane.xlu0 %1123
        %1125 = vadd.xlane.f32.xlu0 %v1076
        %v1126 = vpop.xlane.xlu0 %1125
        %1127 = vadd.xlane.f32.xlu0 %v1077
        %v1128 = vpop.xlane.xlu0 %1127
        %1129 = vadd.xlane.f32.xlu0 %v1078
        %v1130 = vpop.xlane.xlu0 %1129
        %1131 = vadd.xlane.f32.xlu0 %v1079
        %v1132 = vpop.xlane.xlu0 %1131
        %1133 = vadd.xlane.f32.xlu0 %v1080
        %v1134 = vpop.xlane.xlu0 %1133
        %1135 = vadd.xlane.f32.xlu0 %v1081
        %v1136 = vpop.xlane.xlu0 %1135
        %1137 = vadd.xlane.f32.xlu0 %v1082
        %v1138 = vpop.xlane.xlu0 %1137
        %1139 = vadd.xlane.f32.xlu0 %v1083
        %v1140 = vpop.xlane.xlu0 %1139
        %1141 = vadd.xlane.f32.xlu0 %v1084
        %v1142 = vpop.xlane.xlu0 %1141
        %1143 = vadd.xlane.f32.xlu0 %v1085
        %v1144 = vpop.xlane.xlu0 %1143
        %1145 = vadd.xlane.f32.xlu0 %v1086
        %v1146 = vpop.xlane.xlu0 %1145
        %1147 = vadd.xlane.f32.xlu0 %v1087
        %v1148 = vpop.xlane.xlu0 %1147
        %1149 = vadd.xlane.f32.xlu0 %v1088
        %v1150 = vpop.xlane.xlu0 %1149
        %1151 = vadd.xlane.f32.xlu0 %v1089
        %v1152 = vpop.xlane.xlu0 %1151
        %1153 = vadd.xlane.f32.xlu0 %v1090
        %v1154 = vpop.xlane.xlu0 %1153
        %v1155 = vmul.f32 %v1059, %v1059
        %v1156 = vmul.f32 %v1060, %v1060
        %v1157 = vmul.f32 %v1061, %v1061
        %v1158 = vmul.f32 %v1062, %v1062
        %v1159 = vmul.f32 %v1063, %v1063
        %v1160 = vmul.f32 %v1064, %v1064
        %v1161 = vmul.f32 %v1065, %v1065
        %v1162 = vmul.f32 %v1066, %v1066
        %v1163 = vmul.f32 %v1067, %v1067
        %v1164 = vmul.f32 %v1068, %v1068
        %v1165 = vmul.f32 %v1069, %v1069
        %v1166 = vmul.f32 %v1070, %v1070
        %v1167 = vmul.f32 %v1071, %v1071
        %v1168 = vmul.f32 %v1072, %v1072
        %v1169 = vmul.f32 %v1073, %v1073
        %v1170 = vmul.f32 %v1074, %v1074
        %v1171 = vmul.f32 %v1075, %v1075
        %v1172 = vmul.f32 %v1076, %v1076
        %v1173 = vmul.f32 %v1077, %v1077
        %v1174 = vmul.f32 %v1078, %v1078
        %v1175 = vmul.f32 %v1079, %v1079
        %v1176 = vmul.f32 %v1080, %v1080
        %v1177 = vmul.f32 %v1081, %v1081
        %v1178 = vmul.f32 %v1082, %v1082
        %v1179 = vmul.f32 %v1083, %v1083
        %v1180 = vmul.f32 %v1084, %v1084
        %v1181 = vmul.f32 %v1085, %v1085
        %v1182 = vmul.f32 %v1086, %v1086
        %v1183 = vmul.f32 %v1087, %v1087
        %v1184 = vmul.f32 %v1088, %v1088
        %v1185 = vmul.f32 %v1089, %v1089
        %v1186 = vmul.f32 %v1090, %v1090
        %1187 = vadd.xlane.f32.xlu0 %v1155
        %v1188 = vpop.xlane.xlu0 %1187
        %1189 = vadd.xlane.f32.xlu0 %v1156
        %v1190 = vpop.xlane.xlu0 %1189
        %1191 = vadd.xlane.f32.xlu0 %v1157
        %v1192 = vpop.xlane.xlu0 %1191
        %1193 = vadd.xlane.f32.xlu0 %v1158
        %v1194 = vpop.xlane.xlu0 %1193
        %1195 = vadd.xlane.f32.xlu0 %v1159
        %v1196 = vpop.xlane.xlu0 %1195
        %1197 = vadd.xlane.f32.xlu0 %v1160
        %v1198 = vpop.xlane.xlu0 %1197
        %1199 = vadd.xlane.f32.xlu0 %v1161
        %v1200 = vpop.xlane.xlu0 %1199
        %1201 = vadd.xlane.f32.xlu0 %v1162
        %v1202 = vpop.xlane.xlu0 %1201
        %1203 = vadd.xlane.f32.xlu0 %v1163
        %v1204 = vpop.xlane.xlu0 %1203
        %1205 = vadd.xlane.f32.xlu0 %v1164
        %v1206 = vpop.xlane.xlu0 %1205
        %1207 = vadd.xlane.f32.xlu0 %v1165
        %v1208 = vpop.xlane.xlu0 %1207
        %1209 = vadd.xlane.f32.xlu0 %v1166
        %v1210 = vpop.xlane.xlu0 %1209
        %1211 = vadd.xlane.f32.xlu0 %v1167
        %v1212 = vpop.xlane.xlu0 %1211
        %1213 = vadd.xlane.f32.xlu0 %v1168
        %v1214 = vpop.xlane.xlu0 %1213
        %1215 = vadd.xlane.f32.xlu0 %v1169
        %v1216 = vpop.xlane.xlu0 %1215
        %1217 = vadd.xlane.f32.xlu0 %v1170
        %v1218 = vpop.xlane.xlu0 %1217
        %1219 = vadd.xlane.f32.xlu0 %v1171
        %v1220 = vpop.xlane.xlu0 %1219
        %1221 = vadd.xlane.f32.xlu0 %v1172
        %v1222 = vpop.xlane.xlu0 %1221
        %1223 = vadd.xlane.f32.xlu0 %v1173
        %v1224 = vpop.xlane.xlu0 %1223
        %1225 = vadd.xlane.f32.xlu0 %v1174
        %v1226 = vpop.xlane.xlu0 %1225
        %1227 = vadd.xlane.f32.xlu0 %v1175
        %v1228 = vpop.xlane.xlu0 %1227
        %1229 = vadd.xlane.f32.xlu0 %v1176
        %v1230 = vpop.xlane.xlu0 %1229
        %1231 = vadd.xlane.f32.xlu0 %v1177
        %v1232 = vpop.xlane.xlu0 %1231
        %1233 = vadd.xlane.f32.xlu0 %v1178
        %v1234 = vpop.xlane.xlu0 %1233
        %1235 = vadd.xlane.f32.xlu0 %v1179
        %v1236 = vpop.xlane.xlu0 %1235
        %1237 = vadd.xlane.f32.xlu0 %v1180
        %v1238 = vpop.xlane.xlu0 %1237
        %1239 = vadd.xlane.f32.xlu0 %v1181
        %v1240 = vpop.xlane.xlu0 %1239
        %1241 = vadd.xlane.f32.xlu0 %v1182
        %v1242 = vpop.xlane.xlu0 %1241
        %1243 = vadd.xlane.f32.xlu0 %v1183
        %v1244 = vpop.xlane.xlu0 %1243
        %1245 = vadd.xlane.f32.xlu0 %v1184
        %v1246 = vpop.xlane.xlu0 %1245
        %1247 = vadd.xlane.f32.xlu0 %v1185
        %v1248 = vpop.xlane.xlu0 %1247
        %1249 = vadd.xlane.f32.xlu0 %v1186
        %v1250 = vpop.xlane.xlu0 %1249
        %v1251 = vmul.f32 %v1092, 0.0078125
        %v1252 = vmul.f32 %v1094, 0.0078125
        %v1253 = vmul.f32 %v1096, 0.0078125
        %v1254 = vmul.f32 %v1098, 0.0078125
        %v1255 = vmul.f32 %v1100, 0.0078125
        %v1256 = vmul.f32 %v1102, 0.0078125
        %v1257 = vmul.f32 %v1104, 0.0078125
        %v1258 = vmul.f32 %v1106, 0.0078125
        %v1259 = vmul.f32 %v1108, 0.0078125
        %v1260 = vmul.f32 %v1110, 0.0078125
        %v1261 = vmul.f32 %v1112, 0.0078125
        %v1262 = vmul.f32 %v1114, 0.0078125
        %v1263 = vmul.f32 %v1116, 0.0078125
        %v1264 = vmul.f32 %v1118, 0.0078125
        %v1265 = vmul.f32 %v1120, 0.0078125
        %v1266 = vmul.f32 %v1122, 0.0078125
        %v1267 = vmul.f32 %v1124, 0.0078125
        %v1268 = vmul.f32 %v1126, 0.0078125
        %v1269 = vmul.f32 %v1128, 0.0078125
        %v1270 = vmul.f32 %v1130, 0.0078125
        %v1271 = vmul.f32 %v1132, 0.0078125
        %v1272 = vmul.f32 %v1134, 0.0078125
        %v1273 = vmul.f32 %v1136, 0.0078125
        %v1274 = vmul.f32 %v1138, 0.0078125
        %v1275 = vmul.f32 %v1140, 0.0078125
        %v1276 = vmul.f32 %v1142, 0.0078125
        %v1277 = vmul.f32 %v1144, 0.0078125
        %v1278 = vmul.f32 %v1146, 0.0078125
        %v1279 = vmul.f32 %v1148, 0.0078125
        %v1280 = vmul.f32 %v1150, 0.0078125
        %v1281 = vmul.f32 %v1152, 0.0078125
        %v1282 = vmul.f32 %v1154, 0.0078125
        %v1283 = vmul.f32 %v1188, 0.0078125
        %v1284 = vmul.f32 %v1190, 0.0078125
        %v1285 = vmul.f32 %v1192, 0.0078125
        %v1286 = vmul.f32 %v1194, 0.0078125
        %v1287 = vmul.f32 %v1196, 0.0078125
        %v1288 = vmul.f32 %v1198, 0.0078125
        %v1289 = vmul.f32 %v1200, 0.0078125
        %v1290 = vmul.f32 %v1202, 0.0078125
        %v1291 = vmul.f32 %v1204, 0.0078125
        %v1292 = vmul.f32 %v1206, 0.0078125
        %v1293 = vmul.f32 %v1208, 0.0078125
        %v1294 = vmul.f32 %v1210, 0.0078125
        %v1295 = vmul.f32 %v1212, 0.0078125
        %v1296 = vmul.f32 %v1214, 0.0078125
        %v1297 = vmul.f32 %v1216, 0.0078125
        %v1298 = vmul.f32 %v1218, 0.0078125
        %v1299 = vmul.f32 %v1220, 0.0078125
        %v1300 = vmul.f32 %v1222, 0.0078125
        %v1301 = vmul.f32 %v1224, 0.0078125
        %v1302 = vmul.f32 %v1226, 0.0078125
        %v1303 = vmul.f32 %v1228, 0.0078125
        %v1304 = vmul.f32 %v1230, 0.0078125
        %v1305 = vmul.f32 %v1232, 0.0078125
        %v1306 = vmul.f32 %v1234, 0.0078125
        %v1307 = vmul.f32 %v1236, 0.0078125
        %v1308 = vmul.f32 %v1238, 0.0078125
        %v1309 = vmul.f32 %v1240, 0.0078125
        %v1310 = vmul.f32 %v1242, 0.0078125
        %v1311 = vmul.f32 %v1244, 0.0078125
        %v1312 = vmul.f32 %v1246, 0.0078125
        %v1313 = vmul.f32 %v1248, 0.0078125
        %v1314 = vmul.f32 %v1250, 0.0078125
        %v1315 = vmul.f32 %v1251, %v1251
        %v1316 = vmul.f32 %v1252, %v1252
        %v1317 = vmul.f32 %v1253, %v1253
        %v1318 = vmul.f32 %v1254, %v1254
        %v1319 = vmul.f32 %v1255, %v1255
        %v1320 = vmul.f32 %v1256, %v1256
        %v1321 = vmul.f32 %v1257, %v1257
        %v1322 = vmul.f32 %v1258, %v1258
        %v1323 = vmul.f32 %v1259, %v1259
        %v1324 = vmul.f32 %v1260, %v1260
        %v1325 = vmul.f32 %v1261, %v1261
        %v1326 = vmul.f32 %v1262, %v1262
        %v1327 = vmul.f32 %v1263, %v1263
        %v1328 = vmul.f32 %v1264, %v1264
        %v1329 = vmul.f32 %v1265, %v1265
        %v1330 = vmul.f32 %v1266, %v1266
        %v1331 = vmul.f32 %v1267, %v1267
        %v1332 = vmul.f32 %v1268, %v1268
        %v1333 = vmul.f32 %v1269, %v1269
        %v1334 = vmul.f32 %v1270, %v1270
        %v1335 = vmul.f32 %v1271, %v1271
        %v1336 = vmul.f32 %v1272, %v1272
        %v1337 = vmul.f32 %v1273, %v1273
        %v1338 = vmul.f32 %v1274, %v1274
        %v1339 = vmul.f32 %v1275, %v1275
        %v1340 = vmul.f32 %v1276, %v1276
        %v1341 = vmul.f32 %v1277, %v1277
        %v1342 = vmul.f32 %v1278, %v1278
        %v1343 = vmul.f32 %v1279, %v1279
        %v1344 = vmul.f32 %v1280, %v1280
        %v1345 = vmul.f32 %v1281, %v1281
        %v1346 = vmul.f32 %v1282, %v1282
        %v1347 = vsub.f32 %v1283, %v1315
        %v1348 = vsub.f32 %v1284, %v1316
        %v1349 = vsub.f32 %v1285, %v1317
        %v1350 = vsub.f32 %v1286, %v1318
        %v1351 = vsub.f32 %v1287, %v1319
        %v1352 = vsub.f32 %v1288, %v1320
        %v1353 = vsub.f32 %v1289, %v1321
        %v1354 = vsub.f32 %v1290, %v1322
        %v1355 = vsub.f32 %v1291, %v1323
        %v1356 = vsub.f32 %v1292, %v1324
        %v1357 = vsub.f32 %v1293, %v1325
        %v1358 = vsub.f32 %v1294, %v1326
        %v1359 = vsub.f32 %v1295, %v1327
        %v1360 = vsub.f32 %v1296, %v1328
        %v1361 = vsub.f32 %v1297, %v1329
        %v1362 = vsub.f32 %v1298, %v1330
        %v1363 = vsub.f32 %v1299, %v1331
        %v1364 = vsub.f32 %v1300, %v1332
        %v1365 = vsub.f32 %v1301, %v1333
        %v1366 = vsub.f32 %v1302, %v1334
        %v1367 = vsub.f32 %v1303, %v1335
        %v1368 = vsub.f32 %v1304, %v1336
        %v1369 = vsub.f32 %v1305, %v1337
        %v1370 = vsub.f32 %v1306, %v1338
        %v1371 = vsub.f32 %v1307, %v1339
        %v1372 = vsub.f32 %v1308, %v1340
        %v1373 = vsub.f32 %v1309, %v1341
        %v1374 = vsub.f32 %v1310, %v1342
        %v1375 = vsub.f32 %v1311, %v1343
        %v1376 = vsub.f32 %v1312, %v1344
        %v1377 = vsub.f32 %v1313, %v1345
        %v1378 = vsub.f32 %v1314, %v1346
        %v1379 = vsub.f32 %v1059, %v1251
        %v1380 = vsub.f32 %v1060, %v1252
        %v1381 = vsub.f32 %v1061, %v1253
        %v1382 = vsub.f32 %v1062, %v1254
        %v1383 = vsub.f32 %v1063, %v1255
        %v1384 = vsub.f32 %v1064, %v1256
        %v1385 = vsub.f32 %v1065, %v1257
        %v1386 = vsub.f32 %v1066, %v1258
        %v1387 = vsub.f32 %v1067, %v1259
        %v1388 = vsub.f32 %v1068, %v1260
        %v1389 = vsub.f32 %v1069, %v1261
        %v1390 = vsub.f32 %v1070, %v1262
        %v1391 = vsub.f32 %v1071, %v1263
        %v1392 = vsub.f32 %v1072, %v1264
        %v1393 = vsub.f32 %v1073, %v1265
        %v1394 = vsub.f32 %v1074, %v1266
        %v1395 = vsub.f32 %v1075, %v1267
        %v1396 = vsub.f32 %v1076, %v1268
        %v1397 = vsub.f32 %v1077, %v1269
        %v1398 = vsub.f32 %v1078, %v1270
        %v1399 = vsub.f32 %v1079, %v1271
        %v1400 = vsub.f32 %v1080, %v1272
        %v1401 = vsub.f32 %v1081, %v1273
        %v1402 = vsub.f32 %v1082, %v1274
        %v1403 = vsub.f32 %v1083, %v1275
        %v1404 = vsub.f32 %v1084, %v1276
        %v1405 = vsub.f32 %v1085, %v1277
        %v1406 = vsub.f32 %v1086, %v1278
        %v1407 = vsub.f32 %v1087, %v1279
        %v1408 = vsub.f32 %v1088, %v1280
        %v1409 = vsub.f32 %v1089, %v1281
        %v1410 = vsub.f32 %v1090, %v1282
        %v1411 = vadd.f32 %v1347, 1e-05
        %v1412 = vadd.f32 %v1348, 1e-05
        %v1413 = vadd.f32 %v1349, 1e-05
        %v1414 = vadd.f32 %v1350, 1e-05
        %v1415 = vadd.f32 %v1351, 1e-05
        %v1416 = vadd.f32 %v1352, 1e-05
        %v1417 = vadd.f32 %v1353, 1e-05
        %v1418 = vadd.f32 %v1354, 1e-05
        %v1419 = vadd.f32 %v1355, 1e-05
        %v1420 = vadd.f32 %v1356, 1e-05
        %v1421 = vadd.f32 %v1357, 1e-05
        %v1422 = vadd.f32 %v1358, 1e-05
        %v1423 = vadd.f32 %v1359, 1e-05
        %v1424 = vadd.f32 %v1360, 1e-05
        %v1425 = vadd.f32 %v1361, 1e-05
        %v1426 = vadd.f32 %v1362, 1e-05
        %v1427 = vadd.f32 %v1363, 1e-05
        %v1428 = vadd.f32 %v1364, 1e-05
        %v1429 = vadd.f32 %v1365, 1e-05
        %v1430 = vadd.f32 %v1366, 1e-05
        %v1431 = vadd.f32 %v1367, 1e-05
        %v1432 = vadd.f32 %v1368, 1e-05
        %v1433 = vadd.f32 %v1369, 1e-05
        %v1434 = vadd.f32 %v1370, 1e-05
        %v1435 = vadd.f32 %v1371, 1e-05
        %v1436 = vadd.f32 %v1372, 1e-05
        %v1437 = vadd.f32 %v1373, 1e-05
        %v1438 = vadd.f32 %v1374, 1e-05
        %v1439 = vadd.f32 %v1375, 1e-05
        %v1440 = vadd.f32 %v1376, 1e-05
        %v1441 = vadd.f32 %v1377, 1e-05
        %v1442 = vadd.f32 %v1378, 1e-05
        %v1443 = vrsqrt.pop %v1411
        %v1444 = vrsqrt.pop %v1412
        %v1445 = vrsqrt.pop %v1413
        %v1446 = vrsqrt.pop %v1414
        %v1447 = vrsqrt.pop %v1415
        %v1448 = vrsqrt.pop %v1416
        %v1449 = vrsqrt.pop %v1417
        %v1450 = vrsqrt.pop %v1418
        %v1451 = vrsqrt.pop %v1419
        %v1452 = vrsqrt.pop %v1420
        %v1453 = vrsqrt.pop %v1421
        %v1454 = vrsqrt.pop %v1422
        %v1455 = vrsqrt.pop %v1423
        %v1456 = vrsqrt.pop %v1424
        %v1457 = vrsqrt.pop %v1425
        %v1458 = vrsqrt.pop %v1426
        %v1459 = vrsqrt.pop %v1427
        %v1460 = vrsqrt.pop %v1428
        %v1461 = vrsqrt.pop %v1429
        %v1462 = vrsqrt.pop %v1430
        %v1463 = vrsqrt.pop %v1431
        %v1464 = vrsqrt.pop %v1432
        %v1465 = vrsqrt.pop %v1433
        %v1466 = vrsqrt.pop %v1434
        %v1467 = vrsqrt.pop %v1435
        %v1468 = vrsqrt.pop %v1436
        %v1469 = vrsqrt.pop %v1437
        %v1470 = vrsqrt.pop %v1438
        %v1471 = vrsqrt.pop %v1439
        %v1472 = vrsqrt.pop %v1440
        %v1473 = vrsqrt.pop %v1441
        %v1474 = vrsqrt.pop %v1442
        %v1475 = vmul.f32 %v1379, %v1443
        %v1476 = vmul.f32 %v1380, %v1444
        %v1477 = vmul.f32 %v1381, %v1445
        %v1478 = vmul.f32 %v1382, %v1446
        %v1479 = vmul.f32 %v1383, %v1447
        %v1480 = vmul.f32 %v1384, %v1448
        %v1481 = vmul.f32 %v1385, %v1449
        %v1482 = vmul.f32 %v1386, %v1450
        %v1483 = vmul.f32 %v1387, %v1451
        %v1484 = vmul.f32 %v1388, %v1452
        %v1485 = vmul.f32 %v1389, %v1453
        %v1486 = vmul.f32 %v1390, %v1454
        %v1487 = vmul.f32 %v1391, %v1455
        %v1488 = vmul.f32 %v1392, %v1456
        %v1489 = vmul.f32 %v1393, %v1457
        %v1490 = vmul.f32 %v1394, %v1458
        %v1491 = vmul.f32 %v1395, %v1459
        %v1492 = vmul.f32 %v1396, %v1460
        %v1493 = vmul.f32 %v1397, %v1461
        %v1494 = vmul.f32 %v1398, %v1462
        %v1495 = vmul.f32 %v1399, %v1463
        %v1496 = vmul.f32 %v1400, %v1464
        %v1497 = vmul.f32 %v1401, %v1465
        %v1498 = vmul.f32 %v1402, %v1466
        %v1499 = vmul.f32 %v1403, %v1467
        %v1500 = vmul.f32 %v1404, %v1468
        %v1501 = vmul.f32 %v1405, %v1469
        %v1502 = vmul.f32 %v1406, %v1470
        %v1503 = vmul.f32 %v1407, %v1471
        %v1504 = vmul.f32 %v1408, %v1472
        %v1505 = vmul.f32 %v1409, %v1473
        %v1506 = vmul.f32 %v1410, %v1474
        %v1508 = vlaneseq
        %v1509 = vshrl.u32 %v1508, 7
        %v1510 = vsub.s32 0, %v1509
        %v1511 = vrot.slane %v282, %v1510
        %v1513 = vmul.f32 %v1475, %v1511
        %v1514 = vmul.f32 %v1476, %v1511
        %v1515 = vmul.f32 %v1477, %v1511
        %v1516 = vmul.f32 %v1478, %v1511
        %v1517 = vmul.f32 %v1479, %v1511
        %v1518 = vmul.f32 %v1480, %v1511
        %v1519 = vmul.f32 %v1481, %v1511
        %v1520 = vmul.f32 %v1482, %v1511
        %v1521 = vmul.f32 %v1483, %v1511
        %v1522 = vmul.f32 %v1484, %v1511
        %v1523 = vmul.f32 %v1485, %v1511
        %v1524 = vmul.f32 %v1486, %v1511
        %v1525 = vmul.f32 %v1487, %v1511
        %v1526 = vmul.f32 %v1488, %v1511
        %v1527 = vmul.f32 %v1489, %v1511
        %v1528 = vmul.f32 %v1490, %v1511
        %v1529 = vmul.f32 %v1491, %v1511
        %v1530 = vmul.f32 %v1492, %v1511
        %v1531 = vmul.f32 %v1493, %v1511
        %v1532 = vmul.f32 %v1494, %v1511
        %v1533 = vmul.f32 %v1495, %v1511
        %v1534 = vmul.f32 %v1496, %v1511
        %v1535 = vmul.f32 %v1497, %v1511
        %v1536 = vmul.f32 %v1498, %v1511
        %v1537 = vmul.f32 %v1499, %v1511
        %v1538 = vmul.f32 %v1500, %v1511
        %v1539 = vmul.f32 %v1501, %v1511
        %v1540 = vmul.f32 %v1502, %v1511
        %v1541 = vmul.f32 %v1503, %v1511
        %v1542 = vmul.f32 %v1504, %v1511
        %v1543 = vmul.f32 %v1505, %v1511
        %v1544 = vmul.f32 %v1506, %v1511
        %v1546 = vlaneseq
        %v1547 = vshrl.u32 %v1546, 7
        %v1548 = vsub.s32 0, %v1547
        %v1549 = vrot.slane %v283, %v1548
        %v1551 = vadd.f32 %v1513, %v1549
        %v1552 = vadd.f32 %v1514, %v1549
        %v1553 = vadd.f32 %v1515, %v1549
        %v1554 = vadd.f32 %v1516, %v1549
        %v1555 = vadd.f32 %v1517, %v1549
        %v1556 = vadd.f32 %v1518, %v1549
        %v1557 = vadd.f32 %v1519, %v1549
        %v1558 = vadd.f32 %v1520, %v1549
        %v1559 = vadd.f32 %v1521, %v1549
        %v1560 = vadd.f32 %v1522, %v1549
        %v1561 = vadd.f32 %v1523, %v1549
        %v1562 = vadd.f32 %v1524, %v1549
        %v1563 = vadd.f32 %v1525, %v1549
        %v1564 = vadd.f32 %v1526, %v1549
        %v1565 = vadd.f32 %v1527, %v1549
        %v1566 = vadd.f32 %v1528, %v1549
        %v1567 = vadd.f32 %v1529, %v1549
        %v1568 = vadd.f32 %v1530, %v1549
        %v1569 = vadd.f32 %v1531, %v1549
        %v1570 = vadd.f32 %v1532, %v1549
        %v1571 = vadd.f32 %v1533, %v1549
        %v1572 = vadd.f32 %v1534, %v1549
        %v1573 = vadd.f32 %v1535, %v1549
        %v1574 = vadd.f32 %v1536, %v1549
        %v1575 = vadd.f32 %v1537, %v1549
        %v1576 = vadd.f32 %v1538, %v1549
        %v1577 = vadd.f32 %v1539, %v1549
        %v1578 = vadd.f32 %v1540, %v1549
        %v1579 = vadd.f32 %v1541, %v1549
        %v1580 = vadd.f32 %v1542, %v1549
        %v1581 = vadd.f32 %v1543, %v1549
        %v1582 = vadd.f32 %v1544, %v1549
        %1583 = vst [vmem:[%s272] sm:$0xff] %v1551
        %1584 = vst [vmem:[%s272 + $0x8] sm:$0xff] %v1552
        %1585 = vst [vmem:[%s272 + $0x10] sm:$0xff] %v1553
        %1586 = vst [vmem:[%s272 + $0x18] sm:$0xff] %v1554
        %1587 = vst [vmem:[%s272 + $0x20] sm:$0xff] %v1555
        %1588 = vst [vmem:[%s272 + $0x28] sm:$0xff] %v1556
        %1589 = vst [vmem:[%s272 + $0x30] sm:$0xff] %v1557
        %1590 = vst [vmem:[%s272 + $0x38] sm:$0xff] %v1558
        %1591 = vst [vmem:[%s272 + $0x40] sm:$0xff] %v1559
        %1592 = vst [vmem:[%s272 + $0x48] sm:$0xff] %v1560
        %1593 = vst [vmem:[%s272 + $0x50] sm:$0xff] %v1561
        %1594 = vst [vmem:[%s272 + $0x58] sm:$0xff] %v1562
        %1595 = vst [vmem:[%s272 + $0x60] sm:$0xff] %v1563
        %1596 = vst [vmem:[%s272 + $0x68] sm:$0xff] %v1564
        %1597 = vst [vmem:[%s272 + $0x70] sm:$0xff] %v1565
        %1598 = vst [vmem:[%s272 + $0x78] sm:$0xff] %v1566
        %1599 = vst [vmem:[%s272 + $0x80] sm:$0xff] %v1567
        %1600 = vst [vmem:[%s272 + $0x88] sm:$0xff] %v1568
        %1601 = vst [vmem:[%s272 + $0x90] sm:$0xff] %v1569
        %1602 = vst [vmem:[%s272 + $0x98] sm:$0xff] %v1570
        %1603 = vst [vmem:[%s272 + $0xa0] sm:$0xff] %v1571
        %1604 = vst [vmem:[%s272 + $0xa8] sm:$0xff] %v1572
        %1605 = vst [vmem:[%s272 + $0xb0] sm:$0xff] %v1573
        %1606 = vst [vmem:[%s272 + $0xb8] sm:$0xff] %v1574
        %1607 = vst [vmem:[%s272 + $0xc0] sm:$0xff] %v1575
        %1608 = vst [vmem:[%s272 + $0xc8] sm:$0xff] %v1576
        %1609 = vst [vmem:[%s272 + $0xd0] sm:$0xff] %v1577
        %1610 = vst [vmem:[%s272 + $0xd8] sm:$0xff] %v1578
        %1611 = vst [vmem:[%s272 + $0xe0] sm:$0xff] %v1579
        %1612 = vst [vmem:[%s272 + $0xe8] sm:$0xff] %v1580
        %1613 = vst [vmem:[%s272 + $0xf0] sm:$0xff] %v1581
        %1614 = vst [vmem:[%s272 + $0xf8] sm:$0xff] %v1582
        %s1615 = sand.u32 %s181, 1
        %s1616 = scalar_lea.sflag [#allocation3], %s1615
        %s1617 = sand.u32 %s181, 1
        %s1618 = smul.addr %s1617, 256
        %s1619 = scalar_lea.vmem [#allocation2], %s1618
        // Predicated region
        $region49: #{tpu_custom_call.1} parent=47 // pred_check
          %p1620 = pneg %p191
        $region50: #{tpu_custom_call.1} parent=47 // pred_check_branch
          %1622 = sbr.rel (%p1620) target = $region52
        $region51: #{tpu_custom_call.1} parent=47 // pred_region
          %s1623 = smul.u32 32, %s21
          %s1625 = ssub.s32 4096, 4096
          %1626 = vsyncadd %s1616, %s1625
          %s1627 = smul.addr %s1623, 128
          %s1628 = scalar_lea.hbm %s7, %s1627
          %s1629 = sshll.u32 %s1619, 4
          %s1630 = int_to_ptr.vmem [resolvable:$true] %s1629
          %1635 = dma.vmem_to_hbm [thread:$0]  %s1630, 4096, %s1628, %s1616, 128, 128, 8
        $region52: #{tpu_custom_call.1} parent=47 // pred_fallthru
          _
      $region48: #{tpu_custom_call.1} parent=5 // pred_fallthru
        _
      %p1636 = scmp.le.s32.totalorder 2, %s16
      // Predicated region
      $region53: #{tpu_custom_call.1} parent=5 // pred_check
        %p1637 = pneg %p1636
      $region54: #{tpu_custom_call.1} parent=5 // pred_check_branch
        %1639 = sbr.rel (%p1637) target = $region56
      $region55: #{tpu_custom_call.1} parent=5 // pred_region
        %s1640 = ssub.s32 %s16, 2
        // Predicated region
        $region57: #{tpu_custom_call.1} parent=55 // pred_check
          %p1641 = pneg %p197
        $region58: #{tpu_custom_call.1} parent=55 // pred_check_branch
          %1643 = sbr.rel (%p1641) target = $region60
        $region59: #{tpu_custom_call.1} parent=55 // pred_region
          %s1644 = sand.u32 %s182, 1
          %s1645 = scalar_lea.sflag [#allocation3], %s1644
          %s1646 = sand.u32 %s182, 1
          %s1647 = smul.addr %s1646, 256
          %s1648 = scalar_lea.vmem [#allocation2], %s1647
          %1649 = dma.done %s1645, 4096
        $region60: #{tpu_custom_call.1} parent=55 // pred_fallthru
          _
      $region56: #{tpu_custom_call.1} parent=5 // pred_fallthru
        _
    $region6: #{tpu_custom_call.1} parent=1 // loop_footer
      %s20 = sadd.s32 1, %s16
    $region7: #{tpu_custom_call.1} parent=1 // loop_footer_branch
      %15 = sbr.rel target = $region3
    $region8: #{tpu_custom_call.1} parent=1 // loop_exit
      _
    %1650 = vsyncpa [#allocation3], 1
    %s1651 = scalar_lea.sflag [#allocation3], 1
    %1652 = vsyncpa %s1651, 1

</llo_original>
